<compile_context>
chip_gen: v6e
topology: v6e:2x2x1
jax: 0.10.0
libtpu: 0.0.40
codegen_flags: <defaults>
</compile_context>

<pallas_src>
import jax
import jax.numpy as jnp
from jax.experimental import pallas as pl
from jax.experimental.pallas import tpu as pltpu

NUM_CLASSES = 14      # typical CXR label count
NC_PAD = 128          # lane-dense padded classifier width
FEAT_C = 1024         # densenet121 feature channels (fixed by Linear(1024, num_classes))
FEAT_H = 7
FEAT_W = 7
FEAT_HW = FEAT_H * FEAT_W
MAX_BLOCK_B = 64      # cap on images per grid step (VMEM-safe on v5e/v6e/v7x)


def cxr_head_kernel(feat_ref, mask_ref, w_ref, b_ref, out_ref):
    """Fused masked-pool + Linear + Sigmoid head for a block of block_b images.

    feat_ref: (Bt, HW, C)  bf16 backbone features, channels on the lane axis
    mask_ref: (Bt, HW, 1)  f32 binary mask (adpool'd + thresholded >= 0.5)
    w_ref:    (C, NC_PAD)  f32 classifier weight, zero-padded to 128 lanes
    b_ref:    (1, NC_PAD)  f32 classifier bias,   zero-padded to 128 lanes
    out_ref:  (Bt, NC_PAD) f32 sigmoid probabilities (lane-dense store)
    """
    feat = feat_ref[...].astype(jnp.float32)            # upcast once, accumulate in f32
    m = mask_ref[...]                                    # (Bt, HW, 1), broadcast over C

    # mask.repeat over channels + torch.mul + AvgPool2d(7,1) fused: masked global
    # average pool over the 7x7 map, reducing the sublane (HW) axis -> (Bt, C).
    pooled = jnp.sum(feat * m, axis=1) * (1.0 / FEAT_HW)

    # Linear(1024, num_classes): one well-shaped MXU matmul (M=Bt, K=1024, N=128).
    logits = jnp.dot(pooled, w_ref[...],
                     preferred_element_type=jnp.float32) + b_ref[...]

    # Sigmoid (exact form; EUP/VPU are nowhere near the bottleneck here).
    out_ref[...] = 1.0 / (1.0 + jnp.exp(-logits))


def prepare_classifier_params(w_pt, b_pt):
    """One-time parameter prep (call at init, NOT per forward).

    w_pt: (num_classes, 1024) -- PyTorch nn.Linear weight layout.
    b_pt: (num_classes,)      -- PyTorch nn.Linear bias.
    Returns lane-dense padded (1024, 128) weight and (1, 128) bias, f32.
    """
    nc, cin = w_pt.shape
    assert cin == FEAT_C and nc <= NC_PAD
    w_p = jnp.zeros((FEAT_C, NC_PAD), jnp.float32).at[:, :nc].set(
        jnp.transpose(w_pt).astype(jnp.float32))
    b_p = jnp.zeros((1, NC_PAD), jnp.float32).at[0, :nc].set(
        jnp.reshape(b_pt, (-1,)).astype(jnp.float32))
    return w_p, b_p


def _pick_block_b(bp):
    """Pick images-per-grid-step: multiple of 8, divides bp, prefers >= 2 grid steps
    (so v7x's two TensorCores both get work), capped for VMEM safety."""
    divisors = [bb for bb in range(8, min(MAX_BLOCK_B, bp) + 1, 8) if bp % bb == 0]
    if not divisors:
        return 8
    two_step = [bb for bb in divisors if bp // bb >= 2]
    return max(two_step) if two_step else max(divisors)


@jax.jit
def cxrnet_head(feat_nchw, mask_nchw, w_p, b_p):
    """feat_nchw: (B, 1024, 7, 7) backbone features (bf16 or f32);
    mask_nchw: (B, 1, Hm, Wm) soft mask; w_p/b_p from prepare_classifier_params."""
    B, C, H, W = feat_nchw.shape
    assert (C, H, W) == (FEAT_C, FEAT_H, FEAT_W)
    HW = H * W

    # adpool: adaptive average pool of the mask down to the 7x7 feature grid
    # (assumes mask spatial dims are integer multiples of 7), then threshold (>= 0.5).
    Bm, Cm, Hm, Wm = mask_nchw.shape
    assert Bm == B and Cm == 1 and Hm % H == 0 and Wm % W == 0
    m = mask_nchw.reshape(B, 1, H, Hm // H, W, Wm // W).mean(axis=(3, 5))   # (B,1,7,7)
    m = (m >= 0.5).astype(jnp.float32).reshape(B, HW, 1)                    # (B,49,1)

    # Lane-dense layout: channels on the lane axis.  Kept bf16 (or whatever the backbone
    # emits) so HBM traffic is minimal; the kernel upcasts to f32.
    # TODO(synk): in production fuse this NCHW->NHWC relayout into the backbone's last op.
    feat = jnp.transpose(feat_nchw, (0, 2, 3, 1)).reshape(B, HW, C)         # (B,49,1024)

    # Choose the per-step batch tile.  In the common case (B a multiple of 8) block_b
    # divides B exactly and no feature-map padding happens at all.
    Bp = pl.cdiv(B, 8) * 8
    block_b = _pick_block_b(Bp)
    if Bp != B:
        # TODO(synk): for ragged batches prefer handling the tail block in-kernel; this
        # pad copies the feature map in HBM and only exists as a rare fallback.
        feat = jnp.pad(feat, ((0, Bp - B), (0, 0), (0, 0)))
        m = jnp.pad(m, ((0, Bp - B), (0, 0), (0, 0)))

    out = pl.pallas_call(
        cxr_head_kernel,
        out_shape=jax.ShapeDtypeStruct((Bp, NC_PAD), jnp.float32),
        grid=(Bp // block_b,),
        in_specs=[
            pl.BlockSpec((block_b, HW, C), lambda i: (i, 0, 0)),   # features (lane-dense C)
            pl.BlockSpec((block_b, HW, 1), lambda i: (i, 0, 0)),   # binary mask
            pl.BlockSpec((C, NC_PAD), lambda i: (0, 0)),           # classifier W (resident)
            pl.BlockSpec((1, NC_PAD), lambda i: (0, 0)),           # classifier b (resident)
        ],
        out_specs=pl.BlockSpec((block_b, NC_PAD), lambda i: (i, 0)),
        compiler_params=pltpu.CompilerParams(
            dimension_semantics=("parallel",),
        ),
    )(feat, m, w_p, b_p)

    return out[:B, :NUM_CLASSES]


def _reference(feat_nchw, mask_nchw, w_pt, b_pt):
    """Pure-JAX reference of the same forward semantics (for a sanity check)."""
    feat = feat_nchw.astype(jnp.float32)
    B, C, H, W = feat.shape
    Hm, Wm = mask_nchw.shape[2:]
    m = mask_nchw.reshape(B, 1, H, Hm // H, W, Wm // W).mean(axis=(3, 5))
    m = (m >= 0.5).astype(jnp.float32)                       # (B,1,7,7)
    x = feat * m                                             # broadcast over channels
    x = x.mean(axis=(2, 3))                                  # AvgPool2d(7,1) -> (B, C)
    z = x @ jnp.transpose(w_pt).astype(jnp.float32) + jnp.reshape(b_pt, (1, -1))
    return jax.nn.sigmoid(z)


if __name__ == "__main__":
    key = jax.random.PRNGKey(0)
    k_feat, k_mask, k_w, k_b = jax.random.split(key, 4)

    # Two 8-image grid steps -> exercises the batched, parallel grid axis (v7x: both TCs).
    B = 16
    # Backbone feature map (densenet121.features output, emitted in bf16).
    x_feat = jax.random.normal(
        k_feat, (B, FEAT_C, FEAT_H, FEAT_W), dtype=jnp.float32).astype(jnp.bfloat16)
    # Soft mask at 2x the feature resolution (adpool reduces it to 7x7).
    mask = jax.random.uniform(k_mask, (B, 1, 14, 14), dtype=jnp.float32)

    # Classifier parameters in PyTorch nn.Linear layout: weight (num_classes, 1024).
    w_pt = jax.random.normal(k_w, (NUM_CLASSES, FEAT_C), dtype=jnp.float32) * 0.02
    b_pt = jax.random.normal(k_b, (NUM_CLASSES,), dtype=jnp.float32) * 0.01

    # One-time parameter prep (lane-dense padding) outside the forward path.
    w_p, b_p = prepare_classifier_params(w_pt, b_pt)

    out = cxrnet_head(x_feat, mask, w_p, b_p)
    out = jax.block_until_ready(out)

    ref = _reference(x_feat, mask, w_pt, b_pt)
    assert out.shape == (B, NUM_CLASSES)
    assert jnp.allclose(out, ref, rtol=5e-4, atol=1e-4), "mismatch vs pure-JAX reference"

    print("KERNEL_OK")
</pallas_src>

<mosaic_0001>
module attributes {stable_mosaic.version = 11 : i64} {
  func.func @cxr_head_kernel(%arg0: i32, %arg1: memref<8x49x1024xbf16, #tpu.memory_space<vmem>>, %arg2: memref<8x49x1xf32, #tpu.memory_space<vmem>>, %arg3: memref<1024x128xf32, #tpu.memory_space<vmem>>, %arg4: memref<1x128xf32, #tpu.memory_space<vmem>>, %arg5: memref<8x128xf32, #tpu.memory_space<vmem>>) attributes {dimension_semantics = [#tpu.dimension_semantics<parallel>], iteration_bounds = array<i64: 2>, scalar_prefetch = 0 : i64, scratch_operands = 0 : i64, tpu.core_type = #tpu.core_type<tc>, window_params = [{transform_indices = @transform_0, window_bounds = array<i64: 8, 49, 1024>}, {transform_indices = @transform_1, window_bounds = array<i64: 8, 49, 1>}, {pipeline_mode = #tpu.pipeline_mode<synchronous>, transform_indices = @transform_2, window_bounds = array<i64: 1024, 128>}, {pipeline_mode = #tpu.pipeline_mode<synchronous>, transform_indices = @transform_3, window_bounds = array<i64: 1, 128>}, {transform_indices = @transform_4, window_bounds = array<i64: 8, 128>}]} {
    %c0 = arith.constant 0 : index
    %c0_0 = arith.constant 0 : index
    %c0_1 = arith.constant 0 : index
    %0 = vector.load %arg1[%c0, %c0_0, %c0_1] : memref<8x49x1024xbf16, #tpu.memory_space<vmem>>, vector<8x49x1024xbf16>
    %1 = arith.extf %0 : vector<8x49x1024xbf16> to vector<8x49x1024xf32>
    %c0_2 = arith.constant 0 : index
    %c0_3 = arith.constant 0 : index
    %c0_4 = arith.constant 0 : index
    %2 = vector.load %arg2[%c0_2, %c0_3, %c0_4] : memref<8x49x1xf32, #tpu.memory_space<vmem>>, vector<8x49x1xf32>
    %3 = vector.broadcast %2 : vector<8x49x1xf32> to vector<8x49x1024xf32>
    %4 = arith.mulf %1, %3 : vector<8x49x1024xf32>
    %cst = arith.constant dense<0.000000e+00> : vector<8x1024xf32>
    %5 = vector.multi_reduction <add>, %4, %cst [1] : vector<8x49x1024xf32> to vector<8x1024xf32>
    %cst_5 = arith.constant 0.0204081628 : f32
    %6 = vector.broadcast %cst_5 : f32 to vector<8x1024xf32>
    %7 = arith.mulf %5, %6 : vector<8x1024xf32>
    %c0_6 = arith.constant 0 : index
    %c0_7 = arith.constant 0 : index
    %8 = vector.load %arg3[%c0_6, %c0_7] : memref<1024x128xf32, #tpu.memory_space<vmem>>, vector<1024x128xf32>
    %cst_8 = arith.constant dense<0.000000e+00> : vector<8x128xf32>
    %9 = tpu.matmul %7, %8, %cst_8 {dimension_numbers = #tpu.dot_dimension_numbers<[1], [0], [0], [1], [0, 0, 1, 1], [], []>} : vector<8x1024xf32>, vector<1024x128xf32>, vector<8x128xf32> -> vector<8x128xf32>
    %c0_9 = arith.constant 0 : index
    %c0_10 = arith.constant 0 : index
    %10 = vector.load %arg4[%c0_9, %c0_10] : memref<1x128xf32, #tpu.memory_space<vmem>>, vector<1x128xf32>
    %11 = vector.broadcast %10 : vector<1x128xf32> to vector<8x128xf32>
    %12 = arith.addf %9, %11 : vector<8x128xf32>
    %cst_11 = arith.constant 0.000000e+00 : f32
    %13 = vector.broadcast %cst_11 : f32 to vector<8x128xf32>
    %14 = arith.subf %13, %12 : vector<8x128xf32>
    %15 = math.exp %14 : vector<8x128xf32>
    %cst_12 = arith.constant 1.000000e+00 : f32
    %16 = vector.broadcast %cst_12 : f32 to vector<8x128xf32>
    %17 = arith.addf %16, %15 : vector<8x128xf32>
    %cst_13 = arith.constant 1.000000e+00 : f32
    %18 = vector.broadcast %cst_13 : f32 to vector<8x128xf32>
    %19 = arith.divf %18, %17 : vector<8x128xf32>
    %c0_14 = arith.constant 0 : index
    %c0_15 = arith.constant 0 : index
    %20 = vector.load %arg5[%c0_14, %c0_15] : memref<8x128xf32, #tpu.memory_space<vmem>>, vector<8x128xf32>
    tpu.vector_store %arg5[%c0_14, %c0_15], %19 {strides = array<i32>} : memref<8x128xf32, #tpu.memory_space<vmem>>, vector<8x128xf32>,
    return
  }
  func.func @transform_0(%arg0: i32) -> (i32, i32, i32) {
    %c0_i32 = arith.constant 0 : i32
    %c0_i32_0 = arith.constant 0 : i32
    %c0_i32_1 = arith.constant 0 : i32
    return %arg0, %c0_i32, %c0_i32_0 : i32, i32, i32
  }
  func.func @transform_1(%arg0: i32) -> (i32, i32, i32) {
    %c0_i32 = arith.constant 0 : i32
    %c0_i32_0 = arith.constant 0 : i32
    %c0_i32_1 = arith.constant 0 : i32
    return %arg0, %c0_i32, %c0_i32_0 : i32, i32, i32
  }
  func.func @transform_2(%arg0: i32) -> (i32, i32) {
    %c0_i32 = arith.constant 0 : i32
    %c0_i32_0 = arith.constant 0 : i32
    %c0_i32_1 = arith.constant 0 : i32
    return %c0_i32, %c0_i32_0 : i32, i32
  }
  func.func @transform_3(%arg0: i32) -> (i32, i32) {
    %c0_i32 = arith.constant 0 : i32
    %c0_i32_0 = arith.constant 0 : i32
    %c0_i32_1 = arith.constant 0 : i32
    return %c0_i32, %c0_i32_0 : i32, i32
  }
  func.func @transform_4(%arg0: i32) -> (i32, i32) {
    %c0_i32 = arith.constant 0 : i32
    %c0_i32_0 = arith.constant 0 : i32
    return %arg0, %c0_i32 : i32, i32
  }
}

</mosaic_0001>

<llo_original>
// kernel: cxrnet_head.1
$region0: #{cxrnet_head.1}
  #allocation0 [shape = 'u32[]', space=smem, size = 0x4, offset = 0x4, fixed_abs, tag = 'smem constant byte address 0x4 - core index']
  #allocation1 [shape = 'u32[144,128]{1,0:T(1,128)}', space=vmem, size = 0x12000, scoped, tag = 'internal scratch']
  %s0 = inlined_call_operand.vmem [shape: bf16[16,49,1024], index: 0, kind: input, shape index: {}]
  %s1 = inlined_call_operand.vmem [shape: f32[16,49,1], index: 1, kind: input, shape index: {}]
  %s2 = inlined_call_operand.vmem [shape: f32[1024,128], index: 2, kind: input, shape index: {}]
  %s3 = inlined_call_operand.vmem [shape: f32[1,128], index: 3, kind: input, shape index: {}]
  %s4 = inlined_call_operand.hbm [shape: f32[16,128], index: 4, kind: output, shape index: {}]
  %s5 = sld [smem:[#allocation0]]
  $region49: #{cxrnet_head.1} parent=0
    _
  %s7 = ssub.s32 1, %s5
  %s8 = scalar_select 0, %s7, %s5
  $region1: #{cxrnet_head.1} parent=0
    #allocation2 [shape = 'u8[8192]{0}', space=vmem, size = 0x2000, scoped, tag = 'output window, operand 0']
    #allocation3 [shape = 's32[2]{0}', space=sflag, size = 0x8, scoped, tag = 'scoped memory for cxrnet_head.1']
    %9 = vsyncpa [#allocation3], 0
    %s10 = scalar_lea.sflag [#allocation3], 1
    %11 = vsyncpa %s10, 0
    loop: start=0, step=1, limit=4
    $region2: #{cxrnet_head.1} parent=1 // loop_pre_header
      _
    $region3: #{cxrnet_head.1} parent=1 // loop_header
      %s13 = sphi 0, %s17
      %p14 = scmp.ge.s32.totalorder %s13, 4
      %s23 = sphi 0, %s25
      %s26 = sphi 0, %s23
      %s27 = sphi 0, %s26
      %s43 = sphi 0, %s27
      %s49 = sphi 0, %s51
      %s52 = sphi 0, %s49
      %s53 = sphi 0, %s52
      %s69 = sphi 0, %s53
      %s73 = sphi 0, %s73
      %s75 = sphi 0, %s73
      %s76 = sphi 0, %s75
      %s90 = sphi 0, %s76
      %s94 = sphi 0, %s94
      %s96 = sphi 0, %s94
      %s97 = sphi 0, %s96
      %s111 = sphi 0, %s97
      %s117 = sphi 0, %s119
      %s120 = sphi 0, %s117
      %s121 = sphi 0, %s120
      %s137 = sphi 0, %s121
    $region4: #{cxrnet_head.1} parent=1 // loop_header_branch
      %16 = sbr.rel (%p14) target = $region8
    $region5: #{cxrnet_head.1} parent=1 // loop_body
      %s18 = ssub.s32 %s13, 1
      %s19 = ssub.s32 %s13, 2
      %s20 = sadd.s32 %s13, 1
      %s21 = ssub.s32 %s13, %s20
      %p22 = scmp.eq.s32.totalorder %s21, 0
      %s24 = sadd.s32 %s23, 1
      %s25 = scalar_select %p22, %s23, %s24
      %p28 = pneg %p22
      %p29 = scmp.eq.s32.totalorder %s13, 1
      %p30 = por %p28, %p29
      %p31 = scmp.ne.s32.totalorder %s23, %s26
      %p32 = scmp.eq.s32.totalorder %s13, 0
      %p33 = por %p31, %p32
      %p34 = scmp.ne.s32.totalorder %s23, %s26
      %p35 = scmp.eq.s32.totalorder %s18, 1
      %p36 = por %p34, %p35
      %p37 = scmp.ne.s32.totalorder %s26, %s27
      %p38 = scmp.eq.s32.totalorder %s18, 0
      %p39 = por %p37, %p38
      %p40 = scmp.ne.s32.totalorder %s26, %s27
      %p41 = scmp.eq.s32.totalorder %s19, 1
      %p42 = por %p40, %p41
      %p44 = scmp.ne.s32.totalorder %s27, %s43
      %p45 = scmp.eq.s32.totalorder %s19, 0
      %p46 = por %p44, %p45
      %s47 = ssub.s32 %s13, %s20
      %p48 = scmp.eq.s32.totalorder %s47, 0
      %s50 = sadd.s32 %s49, 1
      %s51 = scalar_select %p48, %s49, %s50
      %p54 = pneg %p48
      %p55 = scmp.eq.s32.totalorder %s13, 1
      %p56 = por %p54, %p55
      %p57 = scmp.ne.s32.totalorder %s49, %s52
      %p58 = scmp.eq.s32.totalorder %s13, 0
      %p59 = por %p57, %p58
      %p60 = scmp.ne.s32.totalorder %s49, %s52
      %p61 = scmp.eq.s32.totalorder %s18, 1
      %p62 = por %p60, %p61
      %p63 = scmp.ne.s32.totalorder %s52, %s53
      %p64 = scmp.eq.s32.totalorder %s18, 0
      %p65 = por %p63, %p64
      %p66 = scmp.ne.s32.totalorder %s52, %s53
      %p67 = scmp.eq.s32.totalorder %s19, 1
      %p68 = por %p66, %p67
      %p70 = scmp.ne.s32.totalorder %s53, %s69
      %p71 = scmp.eq.s32.totalorder %s19, 0
      %p72 = por %p70, %p71
      %s74 = sadd.s32 %s73, 1
      %p77 = scmp.eq.s32.totalorder %s13, 1
      %p78 = scmp.ne.s32.totalorder %s73, %s75
      %p79 = scmp.eq.s32.totalorder %s13, 0
      %p80 = por %p78, %p79
      %p81 = scmp.ne.s32.totalorder %s73, %s75
      %p82 = scmp.eq.s32.totalorder %s18, 1
      %p83 = por %p81, %p82
      %p84 = scmp.ne.s32.totalorder %s75, %s76
      %p85 = scmp.eq.s32.totalorder %s18, 0
      %p86 = por %p84, %p85
      %p87 = scmp.ne.s32.totalorder %s75, %s76
      %p88 = scmp.eq.s32.totalorder %s19, 1
      %p89 = por %p87, %p88
      %p91 = scmp.ne.s32.totalorder %s76, %s90
      %p92 = scmp.eq.s32.totalorder %s19, 0
      %p93 = por %p91, %p92
      %s95 = sadd.s32 %s94, 1
      %p98 = scmp.eq.s32.totalorder %s13, 1
      %p99 = scmp.ne.s32.totalorder %s94, %s96
      %p100 = scmp.eq.s32.totalorder %s13, 0
      %p101 = por %p99, %p100
      %p102 = scmp.ne.s32.totalorder %s94, %s96
      %p103 = scmp.eq.s32.totalorder %s18, 1
      %p104 = por %p102, %p103
      %p105 = scmp.ne.s32.totalorder %s96, %s97
      %p106 = scmp.eq.s32.totalorder %s18, 0
      %p107 = por %p105, %p106
      %p108 = scmp.ne.s32.totalorder %s96, %s97
      %p109 = scmp.eq.s32.totalorder %s19, 1
      %p110 = por %p108, %p109
      %p112 = scmp.ne.s32.totalorder %s97, %s111
      %p113 = scmp.eq.s32.totalorder %s19, 0
      %p114 = por %p112, %p113
      %s115 = ssub.s32 %s13, %s20
      %p116 = scmp.eq.s32.totalorder %s115, 0
      %s118 = sadd.s32 %s117, 1
      %s119 = scalar_select %p116, %s117, %s118
      %p122 = pneg %p116
      %p123 = scmp.eq.s32.totalorder %s13, 1
      %p124 = por %p122, %p123
      %p125 = scmp.ne.s32.totalorder %s117, %s120
      %p126 = scmp.eq.s32.totalorder %s13, 0
      %p127 = por %p125, %p126
      %p128 = scmp.ne.s32.totalorder %s117, %s120
      %p129 = scmp.eq.s32.totalorder %s18, 1
      %p130 = por %p128, %p129
      %p131 = scmp.ne.s32.totalorder %s120, %s121
      %p132 = scmp.eq.s32.totalorder %s18, 0
      %p133 = por %p131, %p132
      %p134 = scmp.ne.s32.totalorder %s120, %s121
      %p135 = scmp.eq.s32.totalorder %s19, 1
      %p136 = por %p134, %p135
      %p138 = scmp.ne.s32.totalorder %s121, %s137
      %p139 = scmp.eq.s32.totalorder %s19, 0
      %p140 = por %p138, %p139
      %p141 = scmp.le.s32.totalorder 1, %s13
      %p142 = scmp.lt.s32.totalorder %s13, 3
      %p143 = pnand %p141, %p142
      %p144 = pneg %p143
      // Predicated region
      $region9: #{cxrnet_head.1} parent=5 // pred_check
        _
      $region10: #{cxrnet_head.1} parent=5 // pred_check_branch
        %146 = sbr.rel (%p143) target = $region12
      $region11: #{cxrnet_head.1} parent=5 // pred_region
        %s147 = ssub.s32 %s13, 1
        // Predicated region
        $region13: #{cxrnet_head.1} parent=11 // pred_check
          %p148 = pneg %p86
        $region14: #{cxrnet_head.1} parent=11 // pred_check_branch
          %150 = sbr.rel (%p148) target = $region16
        $region15: #{cxrnet_head.1} parent=11 // pred_region
          _
        $region16: #{cxrnet_head.1} parent=11 // pred_fallthru
          _
        // Predicated region
        $region17: #{cxrnet_head.1} parent=11 // pred_check
          %p151 = pneg %p107
        $region18: #{cxrnet_head.1} parent=11 // pred_check_branch
          %153 = sbr.rel (%p151) target = $region20
        $region19: #{cxrnet_head.1} parent=11 // pred_region
          _
        $region20: #{cxrnet_head.1} parent=11 // pred_fallthru
          _
      $region12: #{cxrnet_head.1} parent=5 // pred_fallthru
        _
      %p154 = scmp.lt.s32.totalorder %s13, 2
      // Predicated region
      $region21: #{cxrnet_head.1} parent=5 // pred_check
        %p155 = pneg %p154
      $region22: #{cxrnet_head.1} parent=5 // pred_check_branch
        %157 = sbr.rel (%p155) target = $region24
      $region23: #{cxrnet_head.1} parent=5 // pred_region
        // Predicated region
        $region25: #{cxrnet_head.1} parent=23 // pred_check
          %p158 = pneg %p33
        $region26: #{cxrnet_head.1} parent=23 // pred_check_branch
          %160 = sbr.rel (%p158) target = $region28
        $region27: #{cxrnet_head.1} parent=23 // pred_region
          %s161 = smul.u32 8, %s13
          %p162 = scmp.lt.s32.totalorder %s161, 15
          %s163 = scalar_select %p162, %s161, 15
          %s164 = smul.addr %s163, 56
          %s165 = smul.addr %s164, 4
          %s166 = scalar_lea.vmem %s0, %s165
          %s167 = smul.u32 8, %s13
        $region28: #{cxrnet_head.1} parent=23 // pred_fallthru
          _
        // Predicated region
        $region29: #{cxrnet_head.1} parent=23 // pred_check
          %p168 = pneg %p59
        $region30: #{cxrnet_head.1} parent=23 // pred_check_branch
          %170 = sbr.rel (%p168) target = $region32
        $region31: #{cxrnet_head.1} parent=23 // pred_region
          %s171 = smul.u32 8, %s13
          %p172 = scmp.lt.s32.totalorder %s171, 15
          %s173 = scalar_select %p172, %s171, 15
          %s174 = smul.addr %s173, 7
          %s175 = smul.addr %s174, 8
          %s176 = scalar_lea.vmem %s1, %s175
          %s177 = smul.u32 8, %s13
        $region32: #{cxrnet_head.1} parent=23 // pred_fallthru
          _
      $region24: #{cxrnet_head.1} parent=5 // pred_fallthru
        _
      %p178 = scmp.le.s32.totalorder 1, %s13
      %p179 = scmp.lt.s32.totalorder %s13, 3
      %p180 = pnand %p178, %p179
      %p181 = pneg %p180
      // Predicated region
      $region33: #{cxrnet_head.1} parent=5 // pred_check
        _
      $region34: #{cxrnet_head.1} parent=5 // pred_check_branch
        %183 = sbr.rel (%p180) target = $region36
      $region35: #{cxrnet_head.1} parent=5 // pred_region
        %s184 = ssub.s32 %s13, 1
        %s185 = smul.u32 8, %s18
        %p186 = scmp.lt.s32.totalorder %s185, 15
        %s187 = scalar_select %p186, %s185, 15
        %s188 = smul.addr %s187, 56
        %s189 = smul.addr %s188, 4
        %s190 = scalar_lea.vmem %s0, %s189
        %p191 = pneg %p39
        %p192 = pneg %p36
        %s193 = smul.u32 8, %s18
        %p194 = scmp.lt.s32.totalorder %s193, 15
        %s195 = scalar_select %p194, %s193, 15
        %s196 = smul.addr %s195, 7
        %s197 = smul.addr %s196, 8
        %s198 = scalar_lea.vmem %s1, %s197
        %p199 = pneg %p65
        %p200 = pneg %p62
        %p201 = pneg %p86
        %p202 = pneg %p83
        %p203 = pneg %p107
        %p204 = pneg %p104
        %p205 = pneg %p133
        %p206 = pneg %p130
        %s207 = sand.u32 %s120, 1
        %s208 = scalar_lea.sflag [#allocation3], %s207
        %s209 = sand.u32 %s120, 1
        %s210 = smul.addr %s209, 8
        %s211 = scalar_lea.vmem [#allocation2], %s210
        %s212 = smul.u32 8, %s18
        %p213 = scmp.lt.s32.totalorder %s212, 15
        %s214 = scalar_select %p213, %s212, 15
        %s215 = smul.addr %s214, 56
        %s216 = smul.addr %s215, 4
        %s217 = scalar_lea.vmem %s0, %s216
        %s218 = smul.u32 8, %s18
        %s219 = smul.u32 8, %s18
        %p220 = scmp.lt.s32.totalorder %s219, 15
        %s221 = scalar_select %p220, %s219, 15
        %s222 = smul.addr %s221, 7
        %s223 = smul.addr %s222, 8
        %s224 = scalar_lea.vmem %s1, %s223
        %s225 = smul.u32 8, %s18
        %v226 = vld [vmem:[%s217] sm:$0xff]
        %v227 = vld [vmem:[%s217 + $0x8] sm:$0xff]
        %v228 = vld [vmem:[%s217 + $0x10] sm:$0xff]
        %v229 = vld [vmem:[%s217 + $0x18] sm:$0xff]
        %v230 = vld [vmem:[%s217 + $0x20] sm:$0xff]
        %v231 = vld [vmem:[%s217 + $0x28] sm:$0xff]
        %v232 = vld [vmem:[%s217 + $0x30] sm:$0xff]
        %v233 = vld [vmem:[%s217 + $0x38] sm:$0xff]
        %v234 = vld [vmem:[%s217 + $0x40] sm:$0xff]
        %v235 = vld [vmem:[%s217 + $0x48] sm:$0xff]
        %v236 = vld [vmem:[%s217 + $0x50] sm:$0xff]
        %v237 = vld [vmem:[%s217 + $0x58] sm:$0xff]
        %v238 = vld [vmem:[%s217 + $0x60] sm:$0xff]
        %v239 = vld [vmem:[%s217 + $0x68] sm:$0xff]
        %v240 = vld [vmem:[%s217 + $0x70] sm:$0xff]
        %v241 = vld [vmem:[%s217 + $0x78] sm:$0xff]
        %v242 = vld [vmem:[%s217 + $0x80] sm:$0xff]
        %v243 = vld [vmem:[%s217 + $0x88] sm:$0xff]
        %v244 = vld [vmem:[%s217 + $0x90] sm:$0xff]
        %v245 = vld [vmem:[%s217 + $0x98] sm:$0xff]
        %v246 = vld [vmem:[%s217 + $0xa0] sm:$0xff]
        %v247 = vld [vmem:[%s217 + $0xa8] sm:$0xff]
        %v248 = vld [vmem:[%s217 + $0xb0] sm:$0xff]
        %v249 = vld [vmem:[%s217 + $0xb8] sm:$0xff]
        %v250 = vld [vmem:[%s217 + $0xc0] sm:$0x11]
        %v251 = vld [vmem:[%s217 + $0xc8] sm:$0x11]
        %v252 = vld [vmem:[%s217 + $0xd0] sm:$0x11]
        %v253 = vld [vmem:[%s217 + $0xd8] sm:$0x11]
        %v254 = vld [vmem:[%s217 + $0xe0] sm:$0xff]
        %v255 = vld [vmem:[%s217 + $0xe8] sm:$0xff]
        %v256 = vld [vmem:[%s217 + $0xf0] sm:$0xff]
        %v257 = vld [vmem:[%s217 + $0xf8] sm:$0xff]
        %v258 = vld [vmem:[%s217 + $0x100] sm:$0xff]
        %v259 = vld [vmem:[%s217 + $0x108] sm:$0xff]
        %v260 = vld [vmem:[%s217 + $0x110] sm:$0xff]
        %v261 = vld [vmem:[%s217 + $0x118] sm:$0xff]
        %v262 = vld [vmem:[%s217 + $0x120] sm:$0xff]
        %v263 = vld [vmem:[%s217 + $0x128] sm:$0xff]
        %v264 = vld [vmem:[%s217 + $0x130] sm:$0xff]
        %v265 = vld [vmem:[%s217 + $0x138] sm:$0xff]
        %v266 = vld [vmem:[%s217 + $0x140] sm:$0xff]
        %v267 = vld [vmem:[%s217 + $0x148] sm:$0xff]
        %v268 = vld [vmem:[%s217 + $0x150] sm:$0xff]
        %v269 = vld [vmem:[%s217 + $0x158] sm:$0xff]
        %v270 = vld [vmem:[%s217 + $0x160] sm:$0xff]
        %v271 = vld [vmem:[%s217 + $0x168] sm:$0xff]
        %v272 = vld [vmem:[%s217 + $0x170] sm:$0xff]
        %v273 = vld [vmem:[%s217 + $0x178] sm:$0xff]
        %v274 = vld [vmem:[%s217 + $0x180] sm:$0xff]
        %v275 = vld [vmem:[%s217 + $0x188] sm:$0xff]
        %v276 = vld [vmem:[%s217 + $0x190] sm:$0xff]
        %v277 = vld [vmem:[%s217 + $0x198] sm:$0xff]
        %v278 = vld [vmem:[%s217 + $0x1a0] sm:$0x11]
        %v279 = vld [vmem:[%s217 + $0x1a8] sm:$0x11]
        %v280 = vld [vmem:[%s217 + $0x1b0] sm:$0x11]
        %v281 = vld [vmem:[%s217 + $0x1b8] sm:$0x11]
        %v282 = vld [vmem:[%s217 + $0x1c0] sm:$0xff]
        %v283 = vld [vmem:[%s217 + $0x1c8] sm:$0xff]
        %v284 = vld [vmem:[%s217 + $0x1d0] sm:$0xff]
        %v285 = vld [vmem:[%s217 + $0x1d8] sm:$0xff]
        %v286 = vld [vmem:[%s217 + $0x1e0] sm:$0xff]
        %v287 = vld [vmem:[%s217 + $0x1e8] sm:$0xff]
        %v288 = vld [vmem:[%s217 + $0x1f0] sm:$0xff]
        %v289 = vld [vmem:[%s217 + $0x1f8] sm:$0xff]
        %v290 = vld [vmem:[%s217 + $0x200] sm:$0xff]
        %v291 = vld [vmem:[%s217 + $0x208] sm:$0xff]
        %v292 = vld [vmem:[%s217 + $0x210] sm:$0xff]
        %v293 = vld [vmem:[%s217 + $0x218] sm:$0xff]
        %v294 = vld [vmem:[%s217 + $0x220] sm:$0xff]
        %v295 = vld [vmem:[%s217 + $0x228] sm:$0xff]
        %v296 = vld [vmem:[%s217 + $0x230] sm:$0xff]
        %v297 = vld [vmem:[%s217 + $0x238] sm:$0xff]
        %v298 = vld [vmem:[%s217 + $0x240] sm:$0xff]
        %v299 = vld [vmem:[%s217 + $0x248] sm:$0xff]
        %v300 = vld [vmem:[%s217 + $0x250] sm:$0xff]
        %v301 = vld [vmem:[%s217 + $0x258] sm:$0xff]
        %v302 = vld [vmem:[%s217 + $0x260] sm:$0xff]
        %v303 = vld [vmem:[%s217 + $0x268] sm:$0xff]
        %v304 = vld [vmem:[%s217 + $0x270] sm:$0xff]
        %v305 = vld [vmem:[%s217 + $0x278] sm:$0xff]
        %v306 = vld [vmem:[%s217 + $0x280] sm:$0x11]
        %v307 = vld [vmem:[%s217 + $0x288] sm:$0x11]
        %v308 = vld [vmem:[%s217 + $0x290] sm:$0x11]
        %v309 = vld [vmem:[%s217 + $0x298] sm:$0x11]
        %v310 = vld [vmem:[%s217 + $0x2a0] sm:$0xff]
        %v311 = vld [vmem:[%s217 + $0x2a8] sm:$0xff]
        %v312 = vld [vmem:[%s217 + $0x2b0] sm:$0xff]
        %v313 = vld [vmem:[%s217 + $0x2b8] sm:$0xff]
        %v314 = vld [vmem:[%s217 + $0x2c0] sm:$0xff]
        %v315 = vld [vmem:[%s217 + $0x2c8] sm:$0xff]
        %v316 = vld [vmem:[%s217 + $0x2d0] sm:$0xff]
        %v317 = vld [vmem:[%s217 + $0x2d8] sm:$0xff]
        %v318 = vld [vmem:[%s217 + $0x2e0] sm:$0xff]
        %v319 = vld [vmem:[%s217 + $0x2e8] sm:$0xff]
        %v320 = vld [vmem:[%s217 + $0x2f0] sm:$0xff]
        %v321 = vld [vmem:[%s217 + $0x2f8] sm:$0xff]
        %v322 = vld [vmem:[%s217 + $0x300] sm:$0xff]
        %v323 = vld [vmem:[%s217 + $0x308] sm:$0xff]
        %v324 = vld [vmem:[%s217 + $0x310] sm:$0xff]
        %v325 = vld [vmem:[%s217 + $0x318] sm:$0xff]
        %v326 = vld [vmem:[%s217 + $0x320] sm:$0xff]
        %v327 = vld [vmem:[%s217 + $0x328] sm:$0xff]
        %v328 = vld [vmem:[%s217 + $0x330] sm:$0xff]
        %v329 = vld [vmem:[%s217 + $0x338] sm:$0xff]
        %v330 = vld [vmem:[%s217 + $0x340] sm:$0xff]
        %v331 = vld [vmem:[%s217 + $0x348] sm:$0xff]
        %v332 = vld [vmem:[%s217 + $0x350] sm:$0xff]
        %v333 = vld [vmem:[%s217 + $0x358] sm:$0xff]
        %v334 = vld [vmem:[%s217 + $0x360] sm:$0x11]
        %v335 = vld [vmem:[%s217 + $0x368] sm:$0x11]
        %v336 = vld [vmem:[%s217 + $0x370] sm:$0x11]
        %v337 = vld [vmem:[%s217 + $0x378] sm:$0x11]
        %v338 = vld [vmem:[%s217 + $0x380] sm:$0xff]
        %v339 = vld [vmem:[%s217 + $0x388] sm:$0xff]
        %v340 = vld [vmem:[%s217 + $0x390] sm:$0xff]
        %v341 = vld [vmem:[%s217 + $0x398] sm:$0xff]
        %v342 = vld [vmem:[%s217 + $0x3a0] sm:$0xff]
        %v343 = vld [vmem:[%s217 + $0x3a8] sm:$0xff]
        %v344 = vld [vmem:[%s217 + $0x3b0] sm:$0xff]
        %v345 = vld [vmem:[%s217 + $0x3b8] sm:$0xff]
        %v346 = vld [vmem:[%s217 + $0x3c0] sm:$0xff]
        %v347 = vld [vmem:[%s217 + $0x3c8] sm:$0xff]
        %v348 = vld [vmem:[%s217 + $0x3d0] sm:$0xff]
        %v349 = vld [vmem:[%s217 + $0x3d8] sm:$0xff]
        %v350 = vld [vmem:[%s217 + $0x3e0] sm:$0xff]
        %v351 = vld [vmem:[%s217 + $0x3e8] sm:$0xff]
        %v352 = vld [vmem:[%s217 + $0x3f0] sm:$0xff]
        %v353 = vld [vmem:[%s217 + $0x3f8] sm:$0xff]
        %v354 = vld [vmem:[%s217 + $0x400] sm:$0xff]
        %v355 = vld [vmem:[%s217 + $0x408] sm:$0xff]
        %v356 = vld [vmem:[%s217 + $0x410] sm:$0xff]
        %v357 = vld [vmem:[%s217 + $0x418] sm:$0xff]
        %v358 = vld [vmem:[%s217 + $0x420] sm:$0xff]
        %v359 = vld [vmem:[%s217 + $0x428] sm:$0xff]
        %v360 = vld [vmem:[%s217 + $0x430] sm:$0xff]
        %v361 = vld [vmem:[%s217 + $0x438] sm:$0xff]
        %v362 = vld [vmem:[%s217 + $0x440] sm:$0x11]
        %v363 = vld [vmem:[%s217 + $0x448] sm:$0x11]
        %v364 = vld [vmem:[%s217 + $0x450] sm:$0x11]
        %v365 = vld [vmem:[%s217 + $0x458] sm:$0x11]
        %v366 = vld [vmem:[%s217 + $0x460] sm:$0xff]
        %v367 = vld [vmem:[%s217 + $0x468] sm:$0xff]
        %v368 = vld [vmem:[%s217 + $0x470] sm:$0xff]
        %v369 = vld [vmem:[%s217 + $0x478] sm:$0xff]
        %v370 = vld [vmem:[%s217 + $0x480] sm:$0xff]
        %v371 = vld [vmem:[%s217 + $0x488] sm:$0xff]
        %v372 = vld [vmem:[%s217 + $0x490] sm:$0xff]
        %v373 = vld [vmem:[%s217 + $0x498] sm:$0xff]
        %v374 = vld [vmem:[%s217 + $0x4a0] sm:$0xff]
        %v375 = vld [vmem:[%s217 + $0x4a8] sm:$0xff]
        %v376 = vld [vmem:[%s217 + $0x4b0] sm:$0xff]
        %v377 = vld [vmem:[%s217 + $0x4b8] sm:$0xff]
        %v378 = vld [vmem:[%s217 + $0x4c0] sm:$0xff]
        %v379 = vld [vmem:[%s217 + $0x4c8] sm:$0xff]
        %v380 = vld [vmem:[%s217 + $0x4d0] sm:$0xff]
        %v381 = vld [vmem:[%s217 + $0x4d8] sm:$0xff]
        %v382 = vld [vmem:[%s217 + $0x4e0] sm:$0xff]
        %v383 = vld [vmem:[%s217 + $0x4e8] sm:$0xff]
        %v384 = vld [vmem:[%s217 + $0x4f0] sm:$0xff]
        %v385 = vld [vmem:[%s217 + $0x4f8] sm:$0xff]
        %v386 = vld [vmem:[%s217 + $0x500] sm:$0xff]
        %v387 = vld [vmem:[%s217 + $0x508] sm:$0xff]
        %v388 = vld [vmem:[%s217 + $0x510] sm:$0xff]
        %v389 = vld [vmem:[%s217 + $0x518] sm:$0xff]
        %v390 = vld [vmem:[%s217 + $0x520] sm:$0x11]
        %v391 = vld [vmem:[%s217 + $0x528] sm:$0x11]
        %v392 = vld [vmem:[%s217 + $0x530] sm:$0x11]
        %v393 = vld [vmem:[%s217 + $0x538] sm:$0x11]
        %v394 = vld [vmem:[%s217 + $0x540] sm:$0xff]
        %v395 = vld [vmem:[%s217 + $0x548] sm:$0xff]
        %v396 = vld [vmem:[%s217 + $0x550] sm:$0xff]
        %v397 = vld [vmem:[%s217 + $0x558] sm:$0xff]
        %v398 = vld [vmem:[%s217 + $0x560] sm:$0xff]
        %v399 = vld [vmem:[%s217 + $0x568] sm:$0xff]
        %v400 = vld [vmem:[%s217 + $0x570] sm:$0xff]
        %v401 = vld [vmem:[%s217 + $0x578] sm:$0xff]
        %v402 = vld [vmem:[%s217 + $0x580] sm:$0xff]
        %v403 = vld [vmem:[%s217 + $0x588] sm:$0xff]
        %v404 = vld [vmem:[%s217 + $0x590] sm:$0xff]
        %v405 = vld [vmem:[%s217 + $0x598] sm:$0xff]
        %v406 = vld [vmem:[%s217 + $0x5a0] sm:$0xff]
        %v407 = vld [vmem:[%s217 + $0x5a8] sm:$0xff]
        %v408 = vld [vmem:[%s217 + $0x5b0] sm:$0xff]
        %v409 = vld [vmem:[%s217 + $0x5b8] sm:$0xff]
        %v410 = vld [vmem:[%s217 + $0x5c0] sm:$0xff]
        %v411 = vld [vmem:[%s217 + $0x5c8] sm:$0xff]
        %v412 = vld [vmem:[%s217 + $0x5d0] sm:$0xff]
        %v413 = vld [vmem:[%s217 + $0x5d8] sm:$0xff]
        %v414 = vld [vmem:[%s217 + $0x5e0] sm:$0xff]
        %v415 = vld [vmem:[%s217 + $0x5e8] sm:$0xff]
        %v416 = vld [vmem:[%s217 + $0x5f0] sm:$0xff]
        %v417 = vld [vmem:[%s217 + $0x5f8] sm:$0xff]
        %v418 = vld [vmem:[%s217 + $0x600] sm:$0x11]
        %v419 = vld [vmem:[%s217 + $0x608] sm:$0x11]
        %v420 = vld [vmem:[%s217 + $0x610] sm:$0x11]
        %v421 = vld [vmem:[%s217 + $0x618] sm:$0x11]
        %v422 = vld [vmem:[%s217 + $0x620] sm:$0xff]
        %v423 = vld [vmem:[%s217 + $0x628] sm:$0xff]
        %v424 = vld [vmem:[%s217 + $0x630] sm:$0xff]
        %v425 = vld [vmem:[%s217 + $0x638] sm:$0xff]
        %v426 = vld [vmem:[%s217 + $0x640] sm:$0xff]
        %v427 = vld [vmem:[%s217 + $0x648] sm:$0xff]
        %v428 = vld [vmem:[%s217 + $0x650] sm:$0xff]
        %v429 = vld [vmem:[%s217 + $0x658] sm:$0xff]
        %v430 = vld [vmem:[%s217 + $0x660] sm:$0xff]
        %v431 = vld [vmem:[%s217 + $0x668] sm:$0xff]
        %v432 = vld [vmem:[%s217 + $0x670] sm:$0xff]
        %v433 = vld [vmem:[%s217 + $0x678] sm:$0xff]
        %v434 = vld [vmem:[%s217 + $0x680] sm:$0xff]
        %v435 = vld [vmem:[%s217 + $0x688] sm:$0xff]
        %v436 = vld [vmem:[%s217 + $0x690] sm:$0xff]
        %v437 = vld [vmem:[%s217 + $0x698] sm:$0xff]
        %v438 = vld [vmem:[%s217 + $0x6a0] sm:$0xff]
        %v439 = vld [vmem:[%s217 + $0x6a8] sm:$0xff]
        %v440 = vld [vmem:[%s217 + $0x6b0] sm:$0xff]
        %v441 = vld [vmem:[%s217 + $0x6b8] sm:$0xff]
        %v442 = vld [vmem:[%s217 + $0x6c0] sm:$0xff]
        %v443 = vld [vmem:[%s217 + $0x6c8] sm:$0xff]
        %v444 = vld [vmem:[%s217 + $0x6d0] sm:$0xff]
        %v445 = vld [vmem:[%s217 + $0x6d8] sm:$0xff]
        %v446 = vld [vmem:[%s217 + $0x6e0] sm:$0x11]
        %v447 = vld [vmem:[%s217 + $0x6e8] sm:$0x11]
        %v448 = vld [vmem:[%s217 + $0x6f0] sm:$0x11]
        %v449 = vld [vmem:[%s217 + $0x6f8] sm:$0x11]
        %v450 = vunpack.c.l.bf16 %v226
        %v451 = vunpack.c.h.bf16 %v226
        %v452 = vunpack.c.l.bf16 %v227
        %v453 = vunpack.c.h.bf16 %v227
        %v454 = vunpack.c.l.bf16 %v228
        %v455 = vunpack.c.h.bf16 %v228
        %v456 = vunpack.c.l.bf16 %v229
        %v457 = vunpack.c.h.bf16 %v229
        %v458 = vunpack.c.l.bf16 %v230
        %v459 = vunpack.c.h.bf16 %v230
        %v460 = vunpack.c.l.bf16 %v231
        %v461 = vunpack.c.h.bf16 %v231
        %v462 = vunpack.c.l.bf16 %v232
        %v463 = vunpack.c.h.bf16 %v232
        %v464 = vunpack.c.l.bf16 %v233
        %v465 = vunpack.c.h.bf16 %v233
        %v466 = vunpack.c.l.bf16 %v234
        %v467 = vunpack.c.h.bf16 %v234
        %v468 = vunpack.c.l.bf16 %v235
        %v469 = vunpack.c.h.bf16 %v235
        %v470 = vunpack.c.l.bf16 %v236
        %v471 = vunpack.c.h.bf16 %v236
        %v472 = vunpack.c.l.bf16 %v237
        %v473 = vunpack.c.h.bf16 %v237
        %v474 = vunpack.c.l.bf16 %v238
        %v475 = vunpack.c.h.bf16 %v238
        %v476 = vunpack.c.l.bf16 %v239
        %v477 = vunpack.c.h.bf16 %v239
        %v478 = vunpack.c.l.bf16 %v240
        %v479 = vunpack.c.h.bf16 %v240
        %v480 = vunpack.c.l.bf16 %v241
        %v481 = vunpack.c.h.bf16 %v241
        %v482 = vunpack.c.l.bf16 %v242
        %v483 = vunpack.c.h.bf16 %v242
        %v484 = vunpack.c.l.bf16 %v243
        %v485 = vunpack.c.h.bf16 %v243
        %v486 = vunpack.c.l.bf16 %v244
        %v487 = vunpack.c.h.bf16 %v244
        %v488 = vunpack.c.l.bf16 %v245
        %v489 = vunpack.c.h.bf16 %v245
        %v490 = vunpack.c.l.bf16 %v246
        %v491 = vunpack.c.h.bf16 %v246
        %v492 = vunpack.c.l.bf16 %v247
        %v493 = vunpack.c.h.bf16 %v247
        %v494 = vunpack.c.l.bf16 %v248
        %v495 = vunpack.c.h.bf16 %v248
        %v496 = vunpack.c.l.bf16 %v249
        %v497 = vunpack.c.h.bf16 %v249
        %v498 = vunpack.c.l.bf16 %v250
        %v499 = vunpack.c.h.bf16 %v250
        %v500 = vunpack.c.l.bf16 %v251
        %v501 = vunpack.c.h.bf16 %v251
        %v502 = vunpack.c.l.bf16 %v252
        %v503 = vunpack.c.h.bf16 %v252
        %v504 = vunpack.c.l.bf16 %v253
        %v505 = vunpack.c.h.bf16 %v253
        %v506 = vunpack.c.l.bf16 %v254
        %v507 = vunpack.c.h.bf16 %v254
        %v508 = vunpack.c.l.bf16 %v255
        %v509 = vunpack.c.h.bf16 %v255
        %v510 = vunpack.c.l.bf16 %v256
        %v511 = vunpack.c.h.bf16 %v256
        %v512 = vunpack.c.l.bf16 %v257
        %v513 = vunpack.c.h.bf16 %v257
        %v514 = vunpack.c.l.bf16 %v258
        %v515 = vunpack.c.h.bf16 %v258
        %v516 = vunpack.c.l.bf16 %v259
        %v517 = vunpack.c.h.bf16 %v259
        %v518 = vunpack.c.l.bf16 %v260
        %v519 = vunpack.c.h.bf16 %v260
        %v520 = vunpack.c.l.bf16 %v261
        %v521 = vunpack.c.h.bf16 %v261
        %v522 = vunpack.c.l.bf16 %v262
        %v523 = vunpack.c.h.bf16 %v262
        %v524 = vunpack.c.l.bf16 %v263
        %v525 = vunpack.c.h.bf16 %v263
        %v526 = vunpack.c.l.bf16 %v264
        %v527 = vunpack.c.h.bf16 %v264
        %v528 = vunpack.c.l.bf16 %v265
        %v529 = vunpack.c.h.bf16 %v265
        %v530 = vunpack.c.l.bf16 %v266
        %v531 = vunpack.c.h.bf16 %v266
        %v532 = vunpack.c.l.bf16 %v267
        %v533 = vunpack.c.h.bf16 %v267
        %v534 = vunpack.c.l.bf16 %v268
        %v535 = vunpack.c.h.bf16 %v268
        %v536 = vunpack.c.l.bf16 %v269
        %v537 = vunpack.c.h.bf16 %v269
        %v538 = vunpack.c.l.bf16 %v270
        %v539 = vunpack.c.h.bf16 %v270
        %v540 = vunpack.c.l.bf16 %v271
        %v541 = vunpack.c.h.bf16 %v271
        %v542 = vunpack.c.l.bf16 %v272
        %v543 = vunpack.c.h.bf16 %v272
        %v544 = vunpack.c.l.bf16 %v273
        %v545 = vunpack.c.h.bf16 %v273
        %v546 = vunpack.c.l.bf16 %v274
        %v547 = vunpack.c.h.bf16 %v274
        %v548 = vunpack.c.l.bf16 %v275
        %v549 = vunpack.c.h.bf16 %v275
        %v550 = vunpack.c.l.bf16 %v276
        %v551 = vunpack.c.h.bf16 %v276
        %v552 = vunpack.c.l.bf16 %v277
        %v553 = vunpack.c.h.bf16 %v277
        %v554 = vunpack.c.l.bf16 %v278
        %v555 = vunpack.c.h.bf16 %v278
        %v556 = vunpack.c.l.bf16 %v279
        %v557 = vunpack.c.h.bf16 %v279
        %v558 = vunpack.c.l.bf16 %v280
        %v559 = vunpack.c.h.bf16 %v280
        %v560 = vunpack.c.l.bf16 %v281
        %v561 = vunpack.c.h.bf16 %v281
        %v562 = vunpack.c.l.bf16 %v282
        %v563 = vunpack.c.h.bf16 %v282
        %v564 = vunpack.c.l.bf16 %v283
        %v565 = vunpack.c.h.bf16 %v283
        %v566 = vunpack.c.l.bf16 %v284
        %v567 = vunpack.c.h.bf16 %v284
        %v568 = vunpack.c.l.bf16 %v285
        %v569 = vunpack.c.h.bf16 %v285
        %v570 = vunpack.c.l.bf16 %v286
        %v571 = vunpack.c.h.bf16 %v286
        %v572 = vunpack.c.l.bf16 %v287
        %v573 = vunpack.c.h.bf16 %v287
        %v574 = vunpack.c.l.bf16 %v288
        %v575 = vunpack.c.h.bf16 %v288
        %v576 = vunpack.c.l.bf16 %v289
        %v577 = vunpack.c.h.bf16 %v289
        %v578 = vunpack.c.l.bf16 %v290
        %v579 = vunpack.c.h.bf16 %v290
        %v580 = vunpack.c.l.bf16 %v291
        %v581 = vunpack.c.h.bf16 %v291
        %v582 = vunpack.c.l.bf16 %v292
        %v583 = vunpack.c.h.bf16 %v292
        %v584 = vunpack.c.l.bf16 %v293
        %v585 = vunpack.c.h.bf16 %v293
        %v586 = vunpack.c.l.bf16 %v294
        %v587 = vunpack.c.h.bf16 %v294
        %v588 = vunpack.c.l.bf16 %v295
        %v589 = vunpack.c.h.bf16 %v295
        %v590 = vunpack.c.l.bf16 %v296
        %v591 = vunpack.c.h.bf16 %v296
        %v592 = vunpack.c.l.bf16 %v297
        %v593 = vunpack.c.h.bf16 %v297
        %v594 = vunpack.c.l.bf16 %v298
        %v595 = vunpack.c.h.bf16 %v298
        %v596 = vunpack.c.l.bf16 %v299
        %v597 = vunpack.c.h.bf16 %v299
        %v598 = vunpack.c.l.bf16 %v300
        %v599 = vunpack.c.h.bf16 %v300
        %v600 = vunpack.c.l.bf16 %v301
        %v601 = vunpack.c.h.bf16 %v301
        %v602 = vunpack.c.l.bf16 %v302
        %v603 = vunpack.c.h.bf16 %v302
        %v604 = vunpack.c.l.bf16 %v303
        %v605 = vunpack.c.h.bf16 %v303
        %v606 = vunpack.c.l.bf16 %v304
        %v607 = vunpack.c.h.bf16 %v304
        %v608 = vunpack.c.l.bf16 %v305
        %v609 = vunpack.c.h.bf16 %v305
        %v610 = vunpack.c.l.bf16 %v306
        %v611 = vunpack.c.h.bf16 %v306
        %v612 = vunpack.c.l.bf16 %v307
        %v613 = vunpack.c.h.bf16 %v307
        %v614 = vunpack.c.l.bf16 %v308
        %v615 = vunpack.c.h.bf16 %v308
        %v616 = vunpack.c.l.bf16 %v309
        %v617 = vunpack.c.h.bf16 %v309
        %v618 = vunpack.c.l.bf16 %v310
        %v619 = vunpack.c.h.bf16 %v310
        %v620 = vunpack.c.l.bf16 %v311
        %v621 = vunpack.c.h.bf16 %v311
        %v622 = vunpack.c.l.bf16 %v312
        %v623 = vunpack.c.h.bf16 %v312
        %v624 = vunpack.c.l.bf16 %v313
        %v625 = vunpack.c.h.bf16 %v313
        %v626 = vunpack.c.l.bf16 %v314
        %v627 = vunpack.c.h.bf16 %v314
        %v628 = vunpack.c.l.bf16 %v315
        %v629 = vunpack.c.h.bf16 %v315
        %v630 = vunpack.c.l.bf16 %v316
        %v631 = vunpack.c.h.bf16 %v316
        %v632 = vunpack.c.l.bf16 %v317
        %v633 = vunpack.c.h.bf16 %v317
        %v634 = vunpack.c.l.bf16 %v318
        %v635 = vunpack.c.h.bf16 %v318
        %v636 = vunpack.c.l.bf16 %v319
        %v637 = vunpack.c.h.bf16 %v319
        %v638 = vunpack.c.l.bf16 %v320
        %v639 = vunpack.c.h.bf16 %v320
        %v640 = vunpack.c.l.bf16 %v321
        %v641 = vunpack.c.h.bf16 %v321
        %v642 = vunpack.c.l.bf16 %v322
        %v643 = vunpack.c.h.bf16 %v322
        %v644 = vunpack.c.l.bf16 %v323
        %v645 = vunpack.c.h.bf16 %v323
        %v646 = vunpack.c.l.bf16 %v324
        %v647 = vunpack.c.h.bf16 %v324
        %v648 = vunpack.c.l.bf16 %v325
        %v649 = vunpack.c.h.bf16 %v325
        %v650 = vunpack.c.l.bf16 %v326
        %v651 = vunpack.c.h.bf16 %v326
        %v652 = vunpack.c.l.bf16 %v327
        %v653 = vunpack.c.h.bf16 %v327
        %v654 = vunpack.c.l.bf16 %v328
        %v655 = vunpack.c.h.bf16 %v328
        %v656 = vunpack.c.l.bf16 %v329
        %v657 = vunpack.c.h.bf16 %v329
        %v658 = vunpack.c.l.bf16 %v330
        %v659 = vunpack.c.h.bf16 %v330
        %v660 = vunpack.c.l.bf16 %v331
        %v661 = vunpack.c.h.bf16 %v331
        %v662 = vunpack.c.l.bf16 %v332
        %v663 = vunpack.c.h.bf16 %v332
        %v664 = vunpack.c.l.bf16 %v333
        %v665 = vunpack.c.h.bf16 %v333
        %v666 = vunpack.c.l.bf16 %v334
        %v667 = vunpack.c.h.bf16 %v334
        %v668 = vunpack.c.l.bf16 %v335
        %v669 = vunpack.c.h.bf16 %v335
        %v670 = vunpack.c.l.bf16 %v336
        %v671 = vunpack.c.h.bf16 %v336
        %v672 = vunpack.c.l.bf16 %v337
        %v673 = vunpack.c.h.bf16 %v337
        %v674 = vunpack.c.l.bf16 %v338
        %v675 = vunpack.c.h.bf16 %v338
        %v676 = vunpack.c.l.bf16 %v339
        %v677 = vunpack.c.h.bf16 %v339
        %v678 = vunpack.c.l.bf16 %v340
        %v679 = vunpack.c.h.bf16 %v340
        %v680 = vunpack.c.l.bf16 %v341
        %v681 = vunpack.c.h.bf16 %v341
        %v682 = vunpack.c.l.bf16 %v342
        %v683 = vunpack.c.h.bf16 %v342
        %v684 = vunpack.c.l.bf16 %v343
        %v685 = vunpack.c.h.bf16 %v343
        %v686 = vunpack.c.l.bf16 %v344
        %v687 = vunpack.c.h.bf16 %v344
        %v688 = vunpack.c.l.bf16 %v345
        %v689 = vunpack.c.h.bf16 %v345
        %v690 = vunpack.c.l.bf16 %v346
        %v691 = vunpack.c.h.bf16 %v346
        %v692 = vunpack.c.l.bf16 %v347
        %v693 = vunpack.c.h.bf16 %v347
        %v694 = vunpack.c.l.bf16 %v348
        %v695 = vunpack.c.h.bf16 %v348
        %v696 = vunpack.c.l.bf16 %v349
        %v697 = vunpack.c.h.bf16 %v349
        %v698 = vunpack.c.l.bf16 %v350
        %v699 = vunpack.c.h.bf16 %v350
        %v700 = vunpack.c.l.bf16 %v351
        %v701 = vunpack.c.h.bf16 %v351
        %v702 = vunpack.c.l.bf16 %v352
        %v703 = vunpack.c.h.bf16 %v352
        %v704 = vunpack.c.l.bf16 %v353
        %v705 = vunpack.c.h.bf16 %v353
        %v706 = vunpack.c.l.bf16 %v354
        %v707 = vunpack.c.h.bf16 %v354
        %v708 = vunpack.c.l.bf16 %v355
        %v709 = vunpack.c.h.bf16 %v355
        %v710 = vunpack.c.l.bf16 %v356
        %v711 = vunpack.c.h.bf16 %v356
        %v712 = vunpack.c.l.bf16 %v357
        %v713 = vunpack.c.h.bf16 %v357
        %v714 = vunpack.c.l.bf16 %v358
        %v715 = vunpack.c.h.bf16 %v358
        %v716 = vunpack.c.l.bf16 %v359
        %v717 = vunpack.c.h.bf16 %v359
        %v718 = vunpack.c.l.bf16 %v360
        %v719 = vunpack.c.h.bf16 %v360
        %v720 = vunpack.c.l.bf16 %v361
        %v721 = vunpack.c.h.bf16 %v361
        %v722 = vunpack.c.l.bf16 %v362
        %v723 = vunpack.c.h.bf16 %v362
        %v724 = vunpack.c.l.bf16 %v363
        %v725 = vunpack.c.h.bf16 %v363
        %v726 = vunpack.c.l.bf16 %v364
        %v727 = vunpack.c.h.bf16 %v364
        %v728 = vunpack.c.l.bf16 %v365
        %v729 = vunpack.c.h.bf16 %v365
        %v730 = vunpack.c.l.bf16 %v366
        %v731 = vunpack.c.h.bf16 %v366
        %v732 = vunpack.c.l.bf16 %v367
        %v733 = vunpack.c.h.bf16 %v367
        %v734 = vunpack.c.l.bf16 %v368
        %v735 = vunpack.c.h.bf16 %v368
        %v736 = vunpack.c.l.bf16 %v369
        %v737 = vunpack.c.h.bf16 %v369
        %v738 = vunpack.c.l.bf16 %v370
        %v739 = vunpack.c.h.bf16 %v370
        %v740 = vunpack.c.l.bf16 %v371
        %v741 = vunpack.c.h.bf16 %v371
        %v742 = vunpack.c.l.bf16 %v372
        %v743 = vunpack.c.h.bf16 %v372
        %v744 = vunpack.c.l.bf16 %v373
        %v745 = vunpack.c.h.bf16 %v373
        %v746 = vunpack.c.l.bf16 %v374
        %v747 = vunpack.c.h.bf16 %v374
        %v748 = vunpack.c.l.bf16 %v375
        %v749 = vunpack.c.h.bf16 %v375
        %v750 = vunpack.c.l.bf16 %v376
        %v751 = vunpack.c.h.bf16 %v376
        %v752 = vunpack.c.l.bf16 %v377
        %v753 = vunpack.c.h.bf16 %v377
        %v754 = vunpack.c.l.bf16 %v378
        %v755 = vunpack.c.h.bf16 %v378
        %v756 = vunpack.c.l.bf16 %v379
        %v757 = vunpack.c.h.bf16 %v379
        %v758 = vunpack.c.l.bf16 %v380
        %v759 = vunpack.c.h.bf16 %v380
        %v760 = vunpack.c.l.bf16 %v381
        %v761 = vunpack.c.h.bf16 %v381
        %v762 = vunpack.c.l.bf16 %v382
        %v763 = vunpack.c.h.bf16 %v382
        %v764 = vunpack.c.l.bf16 %v383
        %v765 = vunpack.c.h.bf16 %v383
        %v766 = vunpack.c.l.bf16 %v384
        %v767 = vunpack.c.h.bf16 %v384
        %v768 = vunpack.c.l.bf16 %v385
        %v769 = vunpack.c.h.bf16 %v385
        %v770 = vunpack.c.l.bf16 %v386
        %v771 = vunpack.c.h.bf16 %v386
        %v772 = vunpack.c.l.bf16 %v387
        %v773 = vunpack.c.h.bf16 %v387
        %v774 = vunpack.c.l.bf16 %v388
        %v775 = vunpack.c.h.bf16 %v388
        %v776 = vunpack.c.l.bf16 %v389
        %v777 = vunpack.c.h.bf16 %v389
        %v778 = vunpack.c.l.bf16 %v390
        %v779 = vunpack.c.h.bf16 %v390
        %v780 = vunpack.c.l.bf16 %v391
        %v781 = vunpack.c.h.bf16 %v391
        %v782 = vunpack.c.l.bf16 %v392
        %v783 = vunpack.c.h.bf16 %v392
        %v784 = vunpack.c.l.bf16 %v393
        %v785 = vunpack.c.h.bf16 %v393
        %v786 = vunpack.c.l.bf16 %v394
        %v787 = vunpack.c.h.bf16 %v394
        %v788 = vunpack.c.l.bf16 %v395
        %v789 = vunpack.c.h.bf16 %v395
        %v790 = vunpack.c.l.bf16 %v396
        %v791 = vunpack.c.h.bf16 %v396
        %v792 = vunpack.c.l.bf16 %v397
        %v793 = vunpack.c.h.bf16 %v397
        %v794 = vunpack.c.l.bf16 %v398
        %v795 = vunpack.c.h.bf16 %v398
        %v796 = vunpack.c.l.bf16 %v399
        %v797 = vunpack.c.h.bf16 %v399
        %v798 = vunpack.c.l.bf16 %v400
        %v799 = vunpack.c.h.bf16 %v400
        %v800 = vunpack.c.l.bf16 %v401
        %v801 = vunpack.c.h.bf16 %v401
        %v802 = vunpack.c.l.bf16 %v402
        %v803 = vunpack.c.h.bf16 %v402
        %v804 = vunpack.c.l.bf16 %v403
        %v805 = vunpack.c.h.bf16 %v403
        %v806 = vunpack.c.l.bf16 %v404
        %v807 = vunpack.c.h.bf16 %v404
        %v808 = vunpack.c.l.bf16 %v405
        %v809 = vunpack.c.h.bf16 %v405
        %v810 = vunpack.c.l.bf16 %v406
        %v811 = vunpack.c.h.bf16 %v406
        %v812 = vunpack.c.l.bf16 %v407
        %v813 = vunpack.c.h.bf16 %v407
        %v814 = vunpack.c.l.bf16 %v408
        %v815 = vunpack.c.h.bf16 %v408
        %v816 = vunpack.c.l.bf16 %v409
        %v817 = vunpack.c.h.bf16 %v409
        %v818 = vunpack.c.l.bf16 %v410
        %v819 = vunpack.c.h.bf16 %v410
        %v820 = vunpack.c.l.bf16 %v411
        %v821 = vunpack.c.h.bf16 %v411
        %v822 = vunpack.c.l.bf16 %v412
        %v823 = vunpack.c.h.bf16 %v412
        %v824 = vunpack.c.l.bf16 %v413
        %v825 = vunpack.c.h.bf16 %v413
        %v826 = vunpack.c.l.bf16 %v414
        %v827 = vunpack.c.h.bf16 %v414
        %v828 = vunpack.c.l.bf16 %v415
        %v829 = vunpack.c.h.bf16 %v415
        %v830 = vunpack.c.l.bf16 %v416
        %v831 = vunpack.c.h.bf16 %v416
        %v832 = vunpack.c.l.bf16 %v417
        %v833 = vunpack.c.h.bf16 %v417
        %v834 = vunpack.c.l.bf16 %v418
        %v835 = vunpack.c.h.bf16 %v418
        %v836 = vunpack.c.l.bf16 %v419
        %v837 = vunpack.c.h.bf16 %v419
        %v838 = vunpack.c.l.bf16 %v420
        %v839 = vunpack.c.h.bf16 %v420
        %v840 = vunpack.c.l.bf16 %v421
        %v841 = vunpack.c.h.bf16 %v421
        %v842 = vunpack.c.l.bf16 %v422
        %v843 = vunpack.c.h.bf16 %v422
        %v844 = vunpack.c.l.bf16 %v423
        %v845 = vunpack.c.h.bf16 %v423
        %v846 = vunpack.c.l.bf16 %v424
        %v847 = vunpack.c.h.bf16 %v424
        %v848 = vunpack.c.l.bf16 %v425
        %v849 = vunpack.c.h.bf16 %v425
        %v850 = vunpack.c.l.bf16 %v426
        %v851 = vunpack.c.h.bf16 %v426
        %v852 = vunpack.c.l.bf16 %v427
        %v853 = vunpack.c.h.bf16 %v427
        %v854 = vunpack.c.l.bf16 %v428
        %v855 = vunpack.c.h.bf16 %v428
        %v856 = vunpack.c.l.bf16 %v429
        %v857 = vunpack.c.h.bf16 %v429
        %v858 = vunpack.c.l.bf16 %v430
        %v859 = vunpack.c.h.bf16 %v430
        %v860 = vunpack.c.l.bf16 %v431
        %v861 = vunpack.c.h.bf16 %v431
        %v862 = vunpack.c.l.bf16 %v432
        %v863 = vunpack.c.h.bf16 %v432
        %v864 = vunpack.c.l.bf16 %v433
        %v865 = vunpack.c.h.bf16 %v433
        %v866 = vunpack.c.l.bf16 %v434
        %v867 = vunpack.c.h.bf16 %v434
        %v868 = vunpack.c.l.bf16 %v435
        %v869 = vunpack.c.h.bf16 %v435
        %v870 = vunpack.c.l.bf16 %v436
        %v871 = vunpack.c.h.bf16 %v436
        %v872 = vunpack.c.l.bf16 %v437
        %v873 = vunpack.c.h.bf16 %v437
        %v874 = vunpack.c.l.bf16 %v438
        %v875 = vunpack.c.h.bf16 %v438
        %v876 = vunpack.c.l.bf16 %v439
        %v877 = vunpack.c.h.bf16 %v439
        %v878 = vunpack.c.l.bf16 %v440
        %v879 = vunpack.c.h.bf16 %v440
        %v880 = vunpack.c.l.bf16 %v441
        %v881 = vunpack.c.h.bf16 %v441
        %v882 = vunpack.c.l.bf16 %v442
        %v883 = vunpack.c.h.bf16 %v442
        %v884 = vunpack.c.l.bf16 %v443
        %v885 = vunpack.c.h.bf16 %v443
        %v886 = vunpack.c.l.bf16 %v444
        %v887 = vunpack.c.h.bf16 %v444
        %v888 = vunpack.c.l.bf16 %v445
        %v889 = vunpack.c.h.bf16 %v445
        %v890 = vunpack.c.l.bf16 %v446
        %v891 = vunpack.c.h.bf16 %v446
        %v892 = vunpack.c.l.bf16 %v447
        %v893 = vunpack.c.h.bf16 %v447
        %v894 = vunpack.c.l.bf16 %v448
        %v895 = vunpack.c.h.bf16 %v448
        %v896 = vunpack.c.l.bf16 %v449
        %v897 = vunpack.c.h.bf16 %v449
        %v898 = vld [vmem:[%s224] sm:$0xff]
        %v899 = vld [vmem:[%s224 + $0x8] sm:$0xff]
        %v900 = vld [vmem:[%s224 + $0x10] sm:$0xff]
        %v901 = vld [vmem:[%s224 + $0x18] sm:$0xff]
        %v902 = vld [vmem:[%s224 + $0x20] sm:$0xff]
        %v903 = vld [vmem:[%s224 + $0x28] sm:$0xff]
        %v904 = vld [vmem:[%s224 + $0x30] sm:$0x1]
        %v905 = vld [vmem:[%s224 + $0x38] sm:$0xff]
        %v906 = vld [vmem:[%s224 + $0x40] sm:$0xff]
        %v907 = vld [vmem:[%s224 + $0x48] sm:$0xff]
        %v908 = vld [vmem:[%s224 + $0x50] sm:$0xff]
        %v909 = vld [vmem:[%s224 + $0x58] sm:$0xff]
        %v910 = vld [vmem:[%s224 + $0x60] sm:$0xff]
        %v911 = vld [vmem:[%s224 + $0x68] sm:$0x1]
        %v912 = vld [vmem:[%s224 + $0x70] sm:$0xff]
        %v913 = vld [vmem:[%s224 + $0x78] sm:$0xff]
        %v914 = vld [vmem:[%s224 + $0x80] sm:$0xff]
        %v915 = vld [vmem:[%s224 + $0x88] sm:$0xff]
        %v916 = vld [vmem:[%s224 + $0x90] sm:$0xff]
        %v917 = vld [vmem:[%s224 + $0x98] sm:$0xff]
        %v918 = vld [vmem:[%s224 + $0xa0] sm:$0x1]
        %v919 = vld [vmem:[%s224 + $0xa8] sm:$0xff]
        %v920 = vld [vmem:[%s224 + $0xb0] sm:$0xff]
        %v921 = vld [vmem:[%s224 + $0xb8] sm:$0xff]
        %v922 = vld [vmem:[%s224 + $0xc0] sm:$0xff]
        %v923 = vld [vmem:[%s224 + $0xc8] sm:$0xff]
        %v924 = vld [vmem:[%s224 + $0xd0] sm:$0xff]
        %v925 = vld [vmem:[%s224 + $0xd8] sm:$0x1]
        %v926 = vld [vmem:[%s224 + $0xe0] sm:$0xff]
        %v927 = vld [vmem:[%s224 + $0xe8] sm:$0xff]
        %v928 = vld [vmem:[%s224 + $0xf0] sm:$0xff]
        %v929 = vld [vmem:[%s224 + $0xf8] sm:$0xff]
        %v930 = vld [vmem:[%s224 + $0x100] sm:$0xff]
        %v931 = vld [vmem:[%s224 + $0x108] sm:$0xff]
        %v932 = vld [vmem:[%s224 + $0x110] sm:$0x1]
        %v933 = vld [vmem:[%s224 + $0x118] sm:$0xff]
        %v934 = vld [vmem:[%s224 + $0x120] sm:$0xff]
        %v935 = vld [vmem:[%s224 + $0x128] sm:$0xff]
        %v936 = vld [vmem:[%s224 + $0x130] sm:$0xff]
        %v937 = vld [vmem:[%s224 + $0x138] sm:$0xff]
        %v938 = vld [vmem:[%s224 + $0x140] sm:$0xff]
        %v939 = vld [vmem:[%s224 + $0x148] sm:$0x1]
        %v940 = vld [vmem:[%s224 + $0x150] sm:$0xff]
        %v941 = vld [vmem:[%s224 + $0x158] sm:$0xff]
        %v942 = vld [vmem:[%s224 + $0x160] sm:$0xff]
        %v943 = vld [vmem:[%s224 + $0x168] sm:$0xff]
        %v944 = vld [vmem:[%s224 + $0x170] sm:$0xff]
        %v945 = vld [vmem:[%s224 + $0x178] sm:$0xff]
        %v946 = vld [vmem:[%s224 + $0x180] sm:$0x1]
        %v947 = vld [vmem:[%s224 + $0x188] sm:$0xff]
        %v948 = vld [vmem:[%s224 + $0x190] sm:$0xff]
        %v949 = vld [vmem:[%s224 + $0x198] sm:$0xff]
        %v950 = vld [vmem:[%s224 + $0x1a0] sm:$0xff]
        %v951 = vld [vmem:[%s224 + $0x1a8] sm:$0xff]
        %v952 = vld [vmem:[%s224 + $0x1b0] sm:$0xff]
        %v953 = vld [vmem:[%s224 + $0x1b8] sm:$0x1]
        %955 = vset.pattern.permute.xlu0 0
        %956 = vperm.xlu0 %955, %v898
        %v957 = vpop.permute.xlu0 %956
        %960 = vset.pattern.permute.xlu0 0
        %961 = vperm.xlu0 %960, %v899
        %v962 = vpop.permute.xlu0 %961
        %965 = vset.pattern.permute.xlu0 0
        %966 = vperm.xlu0 %965, %v900
        %v967 = vpop.permute.xlu0 %966
        %970 = vset.pattern.permute.xlu0 0
        %971 = vperm.xlu0 %970, %v901
        %v972 = vpop.permute.xlu0 %971
        %975 = vset.pattern.permute.xlu0 0
        %976 = vperm.xlu0 %975, %v902
        %v977 = vpop.permute.xlu0 %976
        %980 = vset.pattern.permute.xlu0 0
        %981 = vperm.xlu0 %980, %v903
        %v982 = vpop.permute.xlu0 %981
        %985 = vset.pattern.permute.xlu0 0
        %986 = vperm.xlu0 %985, %v904
        %v987 = vpop.permute.xlu0 %986
        %990 = vset.pattern.permute.xlu0 0
        %991 = vperm.xlu0 %990, %v905
        %v992 = vpop.permute.xlu0 %991
        %995 = vset.pattern.permute.xlu0 0
        %996 = vperm.xlu0 %995, %v906
        %v997 = vpop.permute.xlu0 %996
        %1000 = vset.pattern.permute.xlu0 0
        %1001 = vperm.xlu0 %1000, %v907
        %v1002 = vpop.permute.xlu0 %1001
        %1005 = vset.pattern.permute.xlu0 0
        %1006 = vperm.xlu0 %1005, %v908
        %v1007 = vpop.permute.xlu0 %1006
        %1010 = vset.pattern.permute.xlu0 0
        %1011 = vperm.xlu0 %1010, %v909
        %v1012 = vpop.permute.xlu0 %1011
        %1015 = vset.pattern.permute.xlu0 0
        %1016 = vperm.xlu0 %1015, %v910
        %v1017 = vpop.permute.xlu0 %1016
        %1020 = vset.pattern.permute.xlu0 0
        %1021 = vperm.xlu0 %1020, %v911
        %v1022 = vpop.permute.xlu0 %1021
        %1025 = vset.pattern.permute.xlu0 0
        %1026 = vperm.xlu0 %1025, %v912
        %v1027 = vpop.permute.xlu0 %1026
        %1030 = vset.pattern.permute.xlu0 0
        %1031 = vperm.xlu0 %1030, %v913
        %v1032 = vpop.permute.xlu0 %1031
        %1035 = vset.pattern.permute.xlu0 0
        %1036 = vperm.xlu0 %1035, %v914
        %v1037 = vpop.permute.xlu0 %1036
        %1040 = vset.pattern.permute.xlu0 0
        %1041 = vperm.xlu0 %1040, %v915
        %v1042 = vpop.permute.xlu0 %1041
        %1045 = vset.pattern.permute.xlu0 0
        %1046 = vperm.xlu0 %1045, %v916
        %v1047 = vpop.permute.xlu0 %1046
        %1050 = vset.pattern.permute.xlu0 0
        %1051 = vperm.xlu0 %1050, %v917
        %v1052 = vpop.permute.xlu0 %1051
        %1055 = vset.pattern.permute.xlu0 0
        %1056 = vperm.xlu0 %1055, %v918
        %v1057 = vpop.permute.xlu0 %1056
        %1060 = vset.pattern.permute.xlu0 0
        %1061 = vperm.xlu0 %1060, %v919
        %v1062 = vpop.permute.xlu0 %1061
        %1065 = vset.pattern.permute.xlu0 0
        %1066 = vperm.xlu0 %1065, %v920
        %v1067 = vpop.permute.xlu0 %1066
        %1070 = vset.pattern.permute.xlu0 0
        %1071 = vperm.xlu0 %1070, %v921
        %v1072 = vpop.permute.xlu0 %1071
        %1075 = vset.pattern.permute.xlu0 0
        %1076 = vperm.xlu0 %1075, %v922
        %v1077 = vpop.permute.xlu0 %1076
        %1080 = vset.pattern.permute.xlu0 0
        %1081 = vperm.xlu0 %1080, %v923
        %v1082 = vpop.permute.xlu0 %1081
        %1085 = vset.pattern.permute.xlu0 0
        %1086 = vperm.xlu0 %1085, %v924
        %v1087 = vpop.permute.xlu0 %1086
        %1090 = vset.pattern.permute.xlu0 0
        %1091 = vperm.xlu0 %1090, %v925
        %v1092 = vpop.permute.xlu0 %1091
        %1095 = vset.pattern.permute.xlu0 0
        %1096 = vperm.xlu0 %1095, %v926
        %v1097 = vpop.permute.xlu0 %1096
        %1100 = vset.pattern.permute.xlu0 0
        %1101 = vperm.xlu0 %1100, %v927
        %v1102 = vpop.permute.xlu0 %1101
        %1105 = vset.pattern.permute.xlu0 0
        %1106 = vperm.xlu0 %1105, %v928
        %v1107 = vpop.permute.xlu0 %1106
        %1110 = vset.pattern.permute.xlu0 0
        %1111 = vperm.xlu0 %1110, %v929
        %v1112 = vpop.permute.xlu0 %1111
        %1115 = vset.pattern.permute.xlu0 0
        %1116 = vperm.xlu0 %1115, %v930
        %v1117 = vpop.permute.xlu0 %1116
        %1120 = vset.pattern.permute.xlu0 0
        %1121 = vperm.xlu0 %1120, %v931
        %v1122 = vpop.permute.xlu0 %1121
        %1125 = vset.pattern.permute.xlu0 0
        %1126 = vperm.xlu0 %1125, %v932
        %v1127 = vpop.permute.xlu0 %1126
        %1130 = vset.pattern.permute.xlu0 0
        %1131 = vperm.xlu0 %1130, %v933
        %v1132 = vpop.permute.xlu0 %1131
        %1135 = vset.pattern.permute.xlu0 0
        %1136 = vperm.xlu0 %1135, %v934
        %v1137 = vpop.permute.xlu0 %1136
        %1140 = vset.pattern.permute.xlu0 0
        %1141 = vperm.xlu0 %1140, %v935
        %v1142 = vpop.permute.xlu0 %1141
        %1145 = vset.pattern.permute.xlu0 0
        %1146 = vperm.xlu0 %1145, %v936
        %v1147 = vpop.permute.xlu0 %1146
        %1150 = vset.pattern.permute.xlu0 0
        %1151 = vperm.xlu0 %1150, %v937
        %v1152 = vpop.permute.xlu0 %1151
        %1155 = vset.pattern.permute.xlu0 0
        %1156 = vperm.xlu0 %1155, %v938
        %v1157 = vpop.permute.xlu0 %1156
        %1160 = vset.pattern.permute.xlu0 0
        %1161 = vperm.xlu0 %1160, %v939
        %v1162 = vpop.permute.xlu0 %1161
        %1165 = vset.pattern.permute.xlu0 0
        %1166 = vperm.xlu0 %1165, %v940
        %v1167 = vpop.permute.xlu0 %1166
        %1170 = vset.pattern.permute.xlu0 0
        %1171 = vperm.xlu0 %1170, %v941
        %v1172 = vpop.permute.xlu0 %1171
        %1175 = vset.pattern.permute.xlu0 0
        %1176 = vperm.xlu0 %1175, %v942
        %v1177 = vpop.permute.xlu0 %1176
        %1180 = vset.pattern.permute.xlu0 0
        %1181 = vperm.xlu0 %1180, %v943
        %v1182 = vpop.permute.xlu0 %1181
        %1185 = vset.pattern.permute.xlu0 0
        %1186 = vperm.xlu0 %1185, %v944
        %v1187 = vpop.permute.xlu0 %1186
        %1190 = vset.pattern.permute.xlu0 0
        %1191 = vperm.xlu0 %1190, %v945
        %v1192 = vpop.permute.xlu0 %1191
        %1195 = vset.pattern.permute.xlu0 0
        %1196 = vperm.xlu0 %1195, %v946
        %v1197 = vpop.permute.xlu0 %1196
        %1200 = vset.pattern.permute.xlu0 0
        %1201 = vperm.xlu0 %1200, %v947
        %v1202 = vpop.permute.xlu0 %1201
        %1205 = vset.pattern.permute.xlu0 0
        %1206 = vperm.xlu0 %1205, %v948
        %v1207 = vpop.permute.xlu0 %1206
        %1210 = vset.pattern.permute.xlu0 0
        %1211 = vperm.xlu0 %1210, %v949
        %v1212 = vpop.permute.xlu0 %1211
        %1215 = vset.pattern.permute.xlu0 0
        %1216 = vperm.xlu0 %1215, %v950
        %v1217 = vpop.permute.xlu0 %1216
        %1220 = vset.pattern.permute.xlu0 0
        %1221 = vperm.xlu0 %1220, %v951
        %v1222 = vpop.permute.xlu0 %1221
        %1225 = vset.pattern.permute.xlu0 0
        %1226 = vperm.xlu0 %1225, %v952
        %v1227 = vpop.permute.xlu0 %1226
        %1230 = vset.pattern.permute.xlu0 0
        %1231 = vperm.xlu0 %1230, %v953
        %v1232 = vpop.permute.xlu0 %1231
        %v1234 = vmul.f32 %v450, %v957
        %v1235 = vmul.f32 %v451, %v957
        %v1236 = vmul.f32 %v452, %v957
        %v1237 = vmul.f32 %v453, %v957
        %v1238 = vmul.f32 %v454, %v957
        %v1239 = vmul.f32 %v455, %v957
        %v1240 = vmul.f32 %v456, %v957
        %v1241 = vmul.f32 %v457, %v957
        %v1242 = vmul.f32 %v458, %v962
        %v1243 = vmul.f32 %v459, %v962
        %v1244 = vmul.f32 %v460, %v962
        %v1245 = vmul.f32 %v461, %v962
        %v1246 = vmul.f32 %v462, %v962
        %v1247 = vmul.f32 %v463, %v962
        %v1248 = vmul.f32 %v464, %v962
        %v1249 = vmul.f32 %v465, %v962
        %v1250 = vmul.f32 %v466, %v967
        %v1251 = vmul.f32 %v467, %v967
        %v1252 = vmul.f32 %v468, %v967
        %v1253 = vmul.f32 %v469, %v967
        %v1254 = vmul.f32 %v470, %v967
        %v1255 = vmul.f32 %v471, %v967
        %v1256 = vmul.f32 %v472, %v967
        %v1257 = vmul.f32 %v473, %v967
        %v1258 = vmul.f32 %v474, %v972
        %v1259 = vmul.f32 %v475, %v972
        %v1260 = vmul.f32 %v476, %v972
        %v1261 = vmul.f32 %v477, %v972
        %v1262 = vmul.f32 %v478, %v972
        %v1263 = vmul.f32 %v479, %v972
        %v1264 = vmul.f32 %v480, %v972
        %v1265 = vmul.f32 %v481, %v972
        %v1266 = vmul.f32 %v482, %v977
        %v1267 = vmul.f32 %v483, %v977
        %v1268 = vmul.f32 %v484, %v977
        %v1269 = vmul.f32 %v485, %v977
        %v1270 = vmul.f32 %v486, %v977
        %v1271 = vmul.f32 %v487, %v977
        %v1272 = vmul.f32 %v488, %v977
        %v1273 = vmul.f32 %v489, %v977
        %v1274 = vmul.f32 %v490, %v982
        %v1275 = vmul.f32 %v491, %v982
        %v1276 = vmul.f32 %v492, %v982
        %v1277 = vmul.f32 %v493, %v982
        %v1278 = vmul.f32 %v494, %v982
        %v1279 = vmul.f32 %v495, %v982
        %v1280 = vmul.f32 %v496, %v982
        %v1281 = vmul.f32 %v497, %v982
        %v1282 = vmul.f32 %v498, %v987
        %v1283 = vmul.f32 %v499, %v987
        %v1284 = vmul.f32 %v500, %v987
        %v1285 = vmul.f32 %v501, %v987
        %v1286 = vmul.f32 %v502, %v987
        %v1287 = vmul.f32 %v503, %v987
        %v1288 = vmul.f32 %v504, %v987
        %v1289 = vmul.f32 %v505, %v987
        %v1290 = vmul.f32 %v506, %v992
        %v1291 = vmul.f32 %v507, %v992
        %v1292 = vmul.f32 %v508, %v992
        %v1293 = vmul.f32 %v509, %v992
        %v1294 = vmul.f32 %v510, %v992
        %v1295 = vmul.f32 %v511, %v992
        %v1296 = vmul.f32 %v512, %v992
        %v1297 = vmul.f32 %v513, %v992
        %v1298 = vmul.f32 %v514, %v997
        %v1299 = vmul.f32 %v515, %v997
        %v1300 = vmul.f32 %v516, %v997
        %v1301 = vmul.f32 %v517, %v997
        %v1302 = vmul.f32 %v518, %v997
        %v1303 = vmul.f32 %v519, %v997
        %v1304 = vmul.f32 %v520, %v997
        %v1305 = vmul.f32 %v521, %v997
        %v1306 = vmul.f32 %v522, %v1002
        %v1307 = vmul.f32 %v523, %v1002
        %v1308 = vmul.f32 %v524, %v1002
        %v1309 = vmul.f32 %v525, %v1002
        %v1310 = vmul.f32 %v526, %v1002
        %v1311 = vmul.f32 %v527, %v1002
        %v1312 = vmul.f32 %v528, %v1002
        %v1313 = vmul.f32 %v529, %v1002
        %v1314 = vmul.f32 %v530, %v1007
        %v1315 = vmul.f32 %v531, %v1007
        %v1316 = vmul.f32 %v532, %v1007
        %v1317 = vmul.f32 %v533, %v1007
        %v1318 = vmul.f32 %v534, %v1007
        %v1319 = vmul.f32 %v535, %v1007
        %v1320 = vmul.f32 %v536, %v1007
        %v1321 = vmul.f32 %v537, %v1007
        %v1322 = vmul.f32 %v538, %v1012
        %v1323 = vmul.f32 %v539, %v1012
        %v1324 = vmul.f32 %v540, %v1012
        %v1325 = vmul.f32 %v541, %v1012
        %v1326 = vmul.f32 %v542, %v1012
        %v1327 = vmul.f32 %v543, %v1012
        %v1328 = vmul.f32 %v544, %v1012
        %v1329 = vmul.f32 %v545, %v1012
        %v1330 = vmul.f32 %v546, %v1017
        %v1331 = vmul.f32 %v547, %v1017
        %v1332 = vmul.f32 %v548, %v1017
        %v1333 = vmul.f32 %v549, %v1017
        %v1334 = vmul.f32 %v550, %v1017
        %v1335 = vmul.f32 %v551, %v1017
        %v1336 = vmul.f32 %v552, %v1017
        %v1337 = vmul.f32 %v553, %v1017
        %v1338 = vmul.f32 %v554, %v1022
        %v1339 = vmul.f32 %v555, %v1022
        %v1340 = vmul.f32 %v556, %v1022
        %v1341 = vmul.f32 %v557, %v1022
        %v1342 = vmul.f32 %v558, %v1022
        %v1343 = vmul.f32 %v559, %v1022
        %v1344 = vmul.f32 %v560, %v1022
        %v1345 = vmul.f32 %v561, %v1022
        %v1346 = vmul.f32 %v562, %v1027
        %v1347 = vmul.f32 %v563, %v1027
        %v1348 = vmul.f32 %v564, %v1027
        %v1349 = vmul.f32 %v565, %v1027
        %v1350 = vmul.f32 %v566, %v1027
        %v1351 = vmul.f32 %v567, %v1027
        %v1352 = vmul.f32 %v568, %v1027
        %v1353 = vmul.f32 %v569, %v1027
        %v1354 = vmul.f32 %v570, %v1032
        %v1355 = vmul.f32 %v571, %v1032
        %v1356 = vmul.f32 %v572, %v1032
        %v1357 = vmul.f32 %v573, %v1032
        %v1358 = vmul.f32 %v574, %v1032
        %v1359 = vmul.f32 %v575, %v1032
        %v1360 = vmul.f32 %v576, %v1032
        %v1361 = vmul.f32 %v577, %v1032
        %v1362 = vmul.f32 %v578, %v1037
        %v1363 = vmul.f32 %v579, %v1037
        %v1364 = vmul.f32 %v580, %v1037
        %v1365 = vmul.f32 %v581, %v1037
        %v1366 = vmul.f32 %v582, %v1037
        %v1367 = vmul.f32 %v583, %v1037
        %v1368 = vmul.f32 %v584, %v1037
        %v1369 = vmul.f32 %v585, %v1037
        %v1370 = vmul.f32 %v586, %v1042
        %v1371 = vmul.f32 %v587, %v1042
        %v1372 = vmul.f32 %v588, %v1042
        %v1373 = vmul.f32 %v589, %v1042
        %v1374 = vmul.f32 %v590, %v1042
        %v1375 = vmul.f32 %v591, %v1042
        %v1376 = vmul.f32 %v592, %v1042
        %v1377 = vmul.f32 %v593, %v1042
        %v1378 = vmul.f32 %v594, %v1047
        %v1379 = vmul.f32 %v595, %v1047
        %v1380 = vmul.f32 %v596, %v1047
        %v1381 = vmul.f32 %v597, %v1047
        %v1382 = vmul.f32 %v598, %v1047
        %v1383 = vmul.f32 %v599, %v1047
        %v1384 = vmul.f32 %v600, %v1047
        %v1385 = vmul.f32 %v601, %v1047
        %v1386 = vmul.f32 %v602, %v1052
        %v1387 = vmul.f32 %v603, %v1052
        %v1388 = vmul.f32 %v604, %v1052
        %v1389 = vmul.f32 %v605, %v1052
        %v1390 = vmul.f32 %v606, %v1052
        %v1391 = vmul.f32 %v607, %v1052
        %v1392 = vmul.f32 %v608, %v1052
        %v1393 = vmul.f32 %v609, %v1052
        %v1394 = vmul.f32 %v610, %v1057
        %v1395 = vmul.f32 %v611, %v1057
        %v1396 = vmul.f32 %v612, %v1057
        %v1397 = vmul.f32 %v613, %v1057
        %v1398 = vmul.f32 %v614, %v1057
        %v1399 = vmul.f32 %v615, %v1057
        %v1400 = vmul.f32 %v616, %v1057
        %v1401 = vmul.f32 %v617, %v1057
        %v1402 = vmul.f32 %v618, %v1062
        %v1403 = vmul.f32 %v619, %v1062
        %v1404 = vmul.f32 %v620, %v1062
        %v1405 = vmul.f32 %v621, %v1062
        %v1406 = vmul.f32 %v622, %v1062
        %v1407 = vmul.f32 %v623, %v1062
        %v1408 = vmul.f32 %v624, %v1062
        %v1409 = vmul.f32 %v625, %v1062
        %v1410 = vmul.f32 %v626, %v1067
        %v1411 = vmul.f32 %v627, %v1067
        %v1412 = vmul.f32 %v628, %v1067
        %v1413 = vmul.f32 %v629, %v1067
        %v1414 = vmul.f32 %v630, %v1067
        %v1415 = vmul.f32 %v631, %v1067
        %v1416 = vmul.f32 %v632, %v1067
        %v1417 = vmul.f32 %v633, %v1067
        %v1418 = vmul.f32 %v634, %v1072
        %v1419 = vmul.f32 %v635, %v1072
        %v1420 = vmul.f32 %v636, %v1072
        %v1421 = vmul.f32 %v637, %v1072
        %v1422 = vmul.f32 %v638, %v1072
        %v1423 = vmul.f32 %v639, %v1072
        %v1424 = vmul.f32 %v640, %v1072
        %v1425 = vmul.f32 %v641, %v1072
        %v1426 = vmul.f32 %v642, %v1077
        %v1427 = vmul.f32 %v643, %v1077
        %v1428 = vmul.f32 %v644, %v1077
        %v1429 = vmul.f32 %v645, %v1077
        %v1430 = vmul.f32 %v646, %v1077
        %v1431 = vmul.f32 %v647, %v1077
        %v1432 = vmul.f32 %v648, %v1077
        %v1433 = vmul.f32 %v649, %v1077
        %v1434 = vmul.f32 %v650, %v1082
        %v1435 = vmul.f32 %v651, %v1082
        %v1436 = vmul.f32 %v652, %v1082
        %v1437 = vmul.f32 %v653, %v1082
        %v1438 = vmul.f32 %v654, %v1082
        %v1439 = vmul.f32 %v655, %v1082
        %v1440 = vmul.f32 %v656, %v1082
        %v1441 = vmul.f32 %v657, %v1082
        %v1442 = vmul.f32 %v658, %v1087
        %v1443 = vmul.f32 %v659, %v1087
        %v1444 = vmul.f32 %v660, %v1087
        %v1445 = vmul.f32 %v661, %v1087
        %v1446 = vmul.f32 %v662, %v1087
        %v1447 = vmul.f32 %v663, %v1087
        %v1448 = vmul.f32 %v664, %v1087
        %v1449 = vmul.f32 %v665, %v1087
        %v1450 = vmul.f32 %v666, %v1092
        %v1451 = vmul.f32 %v667, %v1092
        %v1452 = vmul.f32 %v668, %v1092
        %v1453 = vmul.f32 %v669, %v1092
        %v1454 = vmul.f32 %v670, %v1092
        %v1455 = vmul.f32 %v671, %v1092
        %v1456 = vmul.f32 %v672, %v1092
        %v1457 = vmul.f32 %v673, %v1092
        %v1458 = vmul.f32 %v674, %v1097
        %v1459 = vmul.f32 %v675, %v1097
        %v1460 = vmul.f32 %v676, %v1097
        %v1461 = vmul.f32 %v677, %v1097
        %v1462 = vmul.f32 %v678, %v1097
        %v1463 = vmul.f32 %v679, %v1097
        %v1464 = vmul.f32 %v680, %v1097
        %v1465 = vmul.f32 %v681, %v1097
        %v1466 = vmul.f32 %v682, %v1102
        %v1467 = vmul.f32 %v683, %v1102
        %v1468 = vmul.f32 %v684, %v1102
        %v1469 = vmul.f32 %v685, %v1102
        %v1470 = vmul.f32 %v686, %v1102
        %v1471 = vmul.f32 %v687, %v1102
        %v1472 = vmul.f32 %v688, %v1102
        %v1473 = vmul.f32 %v689, %v1102
        %v1474 = vmul.f32 %v690, %v1107
        %v1475 = vmul.f32 %v691, %v1107
        %v1476 = vmul.f32 %v692, %v1107
        %v1477 = vmul.f32 %v693, %v1107
        %v1478 = vmul.f32 %v694, %v1107
        %v1479 = vmul.f32 %v695, %v1107
        %v1480 = vmul.f32 %v696, %v1107
        %v1481 = vmul.f32 %v697, %v1107
        %v1482 = vmul.f32 %v698, %v1112
        %v1483 = vmul.f32 %v699, %v1112
        %v1484 = vmul.f32 %v700, %v1112
        %v1485 = vmul.f32 %v701, %v1112
        %v1486 = vmul.f32 %v702, %v1112
        %v1487 = vmul.f32 %v703, %v1112
        %v1488 = vmul.f32 %v704, %v1112
        %v1489 = vmul.f32 %v705, %v1112
        %v1490 = vmul.f32 %v706, %v1117
        %v1491 = vmul.f32 %v707, %v1117
        %v1492 = vmul.f32 %v708, %v1117
        %v1493 = vmul.f32 %v709, %v1117
        %v1494 = vmul.f32 %v710, %v1117
        %v1495 = vmul.f32 %v711, %v1117
        %v1496 = vmul.f32 %v712, %v1117
        %v1497 = vmul.f32 %v713, %v1117
        %v1498 = vmul.f32 %v714, %v1122
        %v1499 = vmul.f32 %v715, %v1122
        %v1500 = vmul.f32 %v716, %v1122
        %v1501 = vmul.f32 %v717, %v1122
        %v1502 = vmul.f32 %v718, %v1122
        %v1503 = vmul.f32 %v719, %v1122
        %v1504 = vmul.f32 %v720, %v1122
        %v1505 = vmul.f32 %v721, %v1122
        %v1506 = vmul.f32 %v722, %v1127
        %v1507 = vmul.f32 %v723, %v1127
        %v1508 = vmul.f32 %v724, %v1127
        %v1509 = vmul.f32 %v725, %v1127
        %v1510 = vmul.f32 %v726, %v1127
        %v1511 = vmul.f32 %v727, %v1127
        %v1512 = vmul.f32 %v728, %v1127
        %v1513 = vmul.f32 %v729, %v1127
        %v1514 = vmul.f32 %v730, %v1132
        %v1515 = vmul.f32 %v731, %v1132
        %v1516 = vmul.f32 %v732, %v1132
        %v1517 = vmul.f32 %v733, %v1132
        %v1518 = vmul.f32 %v734, %v1132
        %v1519 = vmul.f32 %v735, %v1132
        %v1520 = vmul.f32 %v736, %v1132
        %v1521 = vmul.f32 %v737, %v1132
        %v1522 = vmul.f32 %v738, %v1137
        %v1523 = vmul.f32 %v739, %v1137
        %v1524 = vmul.f32 %v740, %v1137
        %v1525 = vmul.f32 %v741, %v1137
        %v1526 = vmul.f32 %v742, %v1137
        %v1527 = vmul.f32 %v743, %v1137
        %v1528 = vmul.f32 %v744, %v1137
        %v1529 = vmul.f32 %v745, %v1137
        %v1530 = vmul.f32 %v746, %v1142
        %v1531 = vmul.f32 %v747, %v1142
        %v1532 = vmul.f32 %v748, %v1142
        %v1533 = vmul.f32 %v749, %v1142
        %v1534 = vmul.f32 %v750, %v1142
        %v1535 = vmul.f32 %v751, %v1142
        %v1536 = vmul.f32 %v752, %v1142
        %v1537 = vmul.f32 %v753, %v1142
        %v1538 = vmul.f32 %v754, %v1147
        %v1539 = vmul.f32 %v755, %v1147
        %v1540 = vmul.f32 %v756, %v1147
        %v1541 = vmul.f32 %v757, %v1147
        %v1542 = vmul.f32 %v758, %v1147
        %v1543 = vmul.f32 %v759, %v1147
        %v1544 = vmul.f32 %v760, %v1147
        %v1545 = vmul.f32 %v761, %v1147
        %v1546 = vmul.f32 %v762, %v1152
        %v1547 = vmul.f32 %v763, %v1152
        %v1548 = vmul.f32 %v764, %v1152
        %v1549 = vmul.f32 %v765, %v1152
        %v1550 = vmul.f32 %v766, %v1152
        %v1551 = vmul.f32 %v767, %v1152
        %v1552 = vmul.f32 %v768, %v1152
        %v1553 = vmul.f32 %v769, %v1152
        %v1554 = vmul.f32 %v770, %v1157
        %v1555 = vmul.f32 %v771, %v1157
        %v1556 = vmul.f32 %v772, %v1157
        %v1557 = vmul.f32 %v773, %v1157
        %v1558 = vmul.f32 %v774, %v1157
        %v1559 = vmul.f32 %v775, %v1157
        %v1560 = vmul.f32 %v776, %v1157
        %v1561 = vmul.f32 %v777, %v1157
        %v1562 = vmul.f32 %v778, %v1162
        %v1563 = vmul.f32 %v779, %v1162
        %v1564 = vmul.f32 %v780, %v1162
        %v1565 = vmul.f32 %v781, %v1162
        %v1566 = vmul.f32 %v782, %v1162
        %v1567 = vmul.f32 %v783, %v1162
        %v1568 = vmul.f32 %v784, %v1162
        %v1569 = vmul.f32 %v785, %v1162
        %v1570 = vmul.f32 %v786, %v1167
        %v1571 = vmul.f32 %v787, %v1167
        %v1572 = vmul.f32 %v788, %v1167
        %v1573 = vmul.f32 %v789, %v1167
        %v1574 = vmul.f32 %v790, %v1167
        %v1575 = vmul.f32 %v791, %v1167
        %v1576 = vmul.f32 %v792, %v1167
        %v1577 = vmul.f32 %v793, %v1167
        %v1578 = vmul.f32 %v794, %v1172
        %v1579 = vmul.f32 %v795, %v1172
        %v1580 = vmul.f32 %v796, %v1172
        %v1581 = vmul.f32 %v797, %v1172
        %v1582 = vmul.f32 %v798, %v1172
        %v1583 = vmul.f32 %v799, %v1172
        %v1584 = vmul.f32 %v800, %v1172
        %v1585 = vmul.f32 %v801, %v1172
        %v1586 = vmul.f32 %v802, %v1177
        %v1587 = vmul.f32 %v803, %v1177
        %v1588 = vmul.f32 %v804, %v1177
        %v1589 = vmul.f32 %v805, %v1177
        %v1590 = vmul.f32 %v806, %v1177
        %v1591 = vmul.f32 %v807, %v1177
        %v1592 = vmul.f32 %v808, %v1177
        %v1593 = vmul.f32 %v809, %v1177
        %v1594 = vmul.f32 %v810, %v1182
        %v1595 = vmul.f32 %v811, %v1182
        %v1596 = vmul.f32 %v812, %v1182
        %v1597 = vmul.f32 %v813, %v1182
        %v1598 = vmul.f32 %v814, %v1182
        %v1599 = vmul.f32 %v815, %v1182
        %v1600 = vmul.f32 %v816, %v1182
        %v1601 = vmul.f32 %v817, %v1182
        %v1602 = vmul.f32 %v818, %v1187
        %v1603 = vmul.f32 %v819, %v1187
        %v1604 = vmul.f32 %v820, %v1187
        %v1605 = vmul.f32 %v821, %v1187
        %v1606 = vmul.f32 %v822, %v1187
        %v1607 = vmul.f32 %v823, %v1187
        %v1608 = vmul.f32 %v824, %v1187
        %v1609 = vmul.f32 %v825, %v1187
        %v1610 = vmul.f32 %v826, %v1192
        %v1611 = vmul.f32 %v827, %v1192
        %v1612 = vmul.f32 %v828, %v1192
        %v1613 = vmul.f32 %v829, %v1192
        %v1614 = vmul.f32 %v830, %v1192
        %v1615 = vmul.f32 %v831, %v1192
        %v1616 = vmul.f32 %v832, %v1192
        %v1617 = vmul.f32 %v833, %v1192
        %v1618 = vmul.f32 %v834, %v1197
        %v1619 = vmul.f32 %v835, %v1197
        %v1620 = vmul.f32 %v836, %v1197
        %v1621 = vmul.f32 %v837, %v1197
        %v1622 = vmul.f32 %v838, %v1197
        %v1623 = vmul.f32 %v839, %v1197
        %v1624 = vmul.f32 %v840, %v1197
        %v1625 = vmul.f32 %v841, %v1197
        %v1626 = vmul.f32 %v842, %v1202
        %v1627 = vmul.f32 %v843, %v1202
        %v1628 = vmul.f32 %v844, %v1202
        %v1629 = vmul.f32 %v845, %v1202
        %v1630 = vmul.f32 %v846, %v1202
        %v1631 = vmul.f32 %v847, %v1202
        %v1632 = vmul.f32 %v848, %v1202
        %v1633 = vmul.f32 %v849, %v1202
        %v1634 = vmul.f32 %v850, %v1207
        %v1635 = vmul.f32 %v851, %v1207
        %v1636 = vmul.f32 %v852, %v1207
        %v1637 = vmul.f32 %v853, %v1207
        %v1638 = vmul.f32 %v854, %v1207
        %v1639 = vmul.f32 %v855, %v1207
        %v1640 = vmul.f32 %v856, %v1207
        %v1641 = vmul.f32 %v857, %v1207
        %v1642 = vmul.f32 %v858, %v1212
        %v1643 = vmul.f32 %v859, %v1212
        %v1644 = vmul.f32 %v860, %v1212
        %v1645 = vmul.f32 %v861, %v1212
        %v1646 = vmul.f32 %v862, %v1212
        %v1647 = vmul.f32 %v863, %v1212
        %v1648 = vmul.f32 %v864, %v1212
        %v1649 = vmul.f32 %v865, %v1212
        %v1650 = vmul.f32 %v866, %v1217
        %v1651 = vmul.f32 %v867, %v1217
        %v1652 = vmul.f32 %v868, %v1217
        %v1653 = vmul.f32 %v869, %v1217
        %v1654 = vmul.f32 %v870, %v1217
        %v1655 = vmul.f32 %v871, %v1217
        %v1656 = vmul.f32 %v872, %v1217
        %v1657 = vmul.f32 %v873, %v1217
        %v1658 = vmul.f32 %v874, %v1222
        %v1659 = vmul.f32 %v875, %v1222
        %v1660 = vmul.f32 %v876, %v1222
        %v1661 = vmul.f32 %v877, %v1222
        %v1662 = vmul.f32 %v878, %v1222
        %v1663 = vmul.f32 %v879, %v1222
        %v1664 = vmul.f32 %v880, %v1222
        %v1665 = vmul.f32 %v881, %v1222
        %v1666 = vmul.f32 %v882, %v1227
        %v1667 = vmul.f32 %v883, %v1227
        %v1668 = vmul.f32 %v884, %v1227
        %v1669 = vmul.f32 %v885, %v1227
        %v1670 = vmul.f32 %v886, %v1227
        %v1671 = vmul.f32 %v887, %v1227
        %v1672 = vmul.f32 %v888, %v1227
        %v1673 = vmul.f32 %v889, %v1227
        %v1674 = vmul.f32 %v890, %v1232
        %v1675 = vmul.f32 %v891, %v1232
        %v1676 = vmul.f32 %v892, %v1232
        %v1677 = vmul.f32 %v893, %v1232
        %v1678 = vmul.f32 %v894, %v1232
        %v1679 = vmul.f32 %v895, %v1232
        %v1680 = vmul.f32 %v896, %v1232
        %v1681 = vmul.f32 %v897, %v1232
        %v1682 = vadd.f32 %v1234, %v1242
        %v1683 = vadd.f32 %v1682, %v1250
        %v1684 = vadd.f32 %v1683, %v1258
        %v1685 = vadd.f32 %v1684, %v1266
        %v1686 = vadd.f32 %v1685, %v1274
        %vm1687 = vcmask 1040384
        %v1688 = vsel %vm1687, %v1282, 0.0
        %v1689 = vadd.f32 %v1686, %v1688
        %v1690 = vrot.slane %v1689, 4
        %v1691 = vadd.f32 %v1689, %v1690
        %v1692 = vrot.slane %v1691, 2
        %v1693 = vadd.f32 %v1691, %v1692
        %v1694 = vrot.slane %v1693, 1
        %v1695 = vadd.f32 %v1693, %v1694
        %v1696 = vadd.f32 %v1235, %v1243
        %v1697 = vadd.f32 %v1696, %v1251
        %v1698 = vadd.f32 %v1697, %v1259
        %v1699 = vadd.f32 %v1698, %v1267
        %v1700 = vadd.f32 %v1699, %v1275
        %v1701 = vsel %vm1687, %v1283, 0.0
        %v1702 = vadd.f32 %v1700, %v1701
        %v1703 = vrot.slane %v1702, 4
        %v1704 = vadd.f32 %v1702, %v1703
        %v1705 = vrot.slane %v1704, 2
        %v1706 = vadd.f32 %v1704, %v1705
        %v1707 = vrot.slane %v1706, 1
        %v1708 = vadd.f32 %v1706, %v1707
        %v1709 = vadd.f32 %v1236, %v1244
        %v1710 = vadd.f32 %v1709, %v1252
        %v1711 = vadd.f32 %v1710, %v1260
        %v1712 = vadd.f32 %v1711, %v1268
        %v1713 = vadd.f32 %v1712, %v1276
        %v1714 = vsel %vm1687, %v1284, 0.0
        %v1715 = vadd.f32 %v1713, %v1714
        %v1716 = vrot.slane %v1715, 4
        %v1717 = vadd.f32 %v1715, %v1716
        %v1718 = vrot.slane %v1717, 2
        %v1719 = vadd.f32 %v1717, %v1718
        %v1720 = vrot.slane %v1719, 1
        %v1721 = vadd.f32 %v1719, %v1720
        %v1722 = vadd.f32 %v1237, %v1245
        %v1723 = vadd.f32 %v1722, %v1253
        %v1724 = vadd.f32 %v1723, %v1261
        %v1725 = vadd.f32 %v1724, %v1269
        %v1726 = vadd.f32 %v1725, %v1277
        %v1727 = vsel %vm1687, %v1285, 0.0
        %v1728 = vadd.f32 %v1726, %v1727
        %v1729 = vrot.slane %v1728, 4
        %v1730 = vadd.f32 %v1728, %v1729
        %v1731 = vrot.slane %v1730, 2
        %v1732 = vadd.f32 %v1730, %v1731
        %v1733 = vrot.slane %v1732, 1
        %v1734 = vadd.f32 %v1732, %v1733
        %v1735 = vadd.f32 %v1238, %v1246
        %v1736 = vadd.f32 %v1735, %v1254
        %v1737 = vadd.f32 %v1736, %v1262
        %v1738 = vadd.f32 %v1737, %v1270
        %v1739 = vadd.f32 %v1738, %v1278
        %v1740 = vsel %vm1687, %v1286, 0.0
        %v1741 = vadd.f32 %v1739, %v1740
        %v1742 = vrot.slane %v1741, 4
        %v1743 = vadd.f32 %v1741, %v1742
        %v1744 = vrot.slane %v1743, 2
        %v1745 = vadd.f32 %v1743, %v1744
        %v1746 = vrot.slane %v1745, 1
        %v1747 = vadd.f32 %v1745, %v1746
        %v1748 = vadd.f32 %v1239, %v1247
        %v1749 = vadd.f32 %v1748, %v1255
        %v1750 = vadd.f32 %v1749, %v1263
        %v1751 = vadd.f32 %v1750, %v1271
        %v1752 = vadd.f32 %v1751, %v1279
        %v1753 = vsel %vm1687, %v1287, 0.0
        %v1754 = vadd.f32 %v1752, %v1753
        %v1755 = vrot.slane %v1754, 4
        %v1756 = vadd.f32 %v1754, %v1755
        %v1757 = vrot.slane %v1756, 2
        %v1758 = vadd.f32 %v1756, %v1757
        %v1759 = vrot.slane %v1758, 1
        %v1760 = vadd.f32 %v1758, %v1759
        %v1761 = vadd.f32 %v1240, %v1248
        %v1762 = vadd.f32 %v1761, %v1256
        %v1763 = vadd.f32 %v1762, %v1264
        %v1764 = vadd.f32 %v1763, %v1272
        %v1765 = vadd.f32 %v1764, %v1280
        %v1766 = vsel %vm1687, %v1288, 0.0
        %v1767 = vadd.f32 %v1765, %v1766
        %v1768 = vrot.slane %v1767, 4
        %v1769 = vadd.f32 %v1767, %v1768
        %v1770 = vrot.slane %v1769, 2
        %v1771 = vadd.f32 %v1769, %v1770
        %v1772 = vrot.slane %v1771, 1
        %v1773 = vadd.f32 %v1771, %v1772
        %v1774 = vadd.f32 %v1241, %v1249
        %v1775 = vadd.f32 %v1774, %v1257
        %v1776 = vadd.f32 %v1775, %v1265
        %v1777 = vadd.f32 %v1776, %v1273
        %v1778 = vadd.f32 %v1777, %v1281
        %v1779 = vsel %vm1687, %v1289, 0.0
        %v1780 = vadd.f32 %v1778, %v1779
        %v1781 = vrot.slane %v1780, 4
        %v1782 = vadd.f32 %v1780, %v1781
        %v1783 = vrot.slane %v1782, 2
        %v1784 = vadd.f32 %v1782, %v1783
        %v1785 = vrot.slane %v1784, 1
        %v1786 = vadd.f32 %v1784, %v1785
        %v1787 = vadd.f32 %v1290, %v1298
        %v1788 = vadd.f32 %v1787, %v1306
        %v1789 = vadd.f32 %v1788, %v1314
        %v1790 = vadd.f32 %v1789, %v1322
        %v1791 = vadd.f32 %v1790, %v1330
        %v1792 = vsel %vm1687, %v1338, 0.0
        %v1793 = vadd.f32 %v1791, %v1792
        %v1794 = vrot.slane %v1793, 4
        %v1795 = vadd.f32 %v1793, %v1794
        %v1796 = vrot.slane %v1795, 2
        %v1797 = vadd.f32 %v1795, %v1796
        %v1798 = vrot.slane %v1797, 1
        %v1799 = vadd.f32 %v1797, %v1798
        %v1800 = vadd.f32 %v1291, %v1299
        %v1801 = vadd.f32 %v1800, %v1307
        %v1802 = vadd.f32 %v1801, %v1315
        %v1803 = vadd.f32 %v1802, %v1323
        %v1804 = vadd.f32 %v1803, %v1331
        %v1805 = vsel %vm1687, %v1339, 0.0
        %v1806 = vadd.f32 %v1804, %v1805
        %v1807 = vrot.slane %v1806, 4
        %v1808 = vadd.f32 %v1806, %v1807
        %v1809 = vrot.slane %v1808, 2
        %v1810 = vadd.f32 %v1808, %v1809
        %v1811 = vrot.slane %v1810, 1
        %v1812 = vadd.f32 %v1810, %v1811
        %v1813 = vadd.f32 %v1292, %v1300
        %v1814 = vadd.f32 %v1813, %v1308
        %v1815 = vadd.f32 %v1814, %v1316
        %v1816 = vadd.f32 %v1815, %v1324
        %v1817 = vadd.f32 %v1816, %v1332
        %v1818 = vsel %vm1687, %v1340, 0.0
        %v1819 = vadd.f32 %v1817, %v1818
        %v1820 = vrot.slane %v1819, 4
        %v1821 = vadd.f32 %v1819, %v1820
        %v1822 = vrot.slane %v1821, 2
        %v1823 = vadd.f32 %v1821, %v1822
        %v1824 = vrot.slane %v1823, 1
        %v1825 = vadd.f32 %v1823, %v1824
        %v1826 = vadd.f32 %v1293, %v1301
        %v1827 = vadd.f32 %v1826, %v1309
        %v1828 = vadd.f32 %v1827, %v1317
        %v1829 = vadd.f32 %v1828, %v1325
        %v1830 = vadd.f32 %v1829, %v1333
        %v1831 = vsel %vm1687, %v1341, 0.0
        %v1832 = vadd.f32 %v1830, %v1831
        %v1833 = vrot.slane %v1832, 4
        %v1834 = vadd.f32 %v1832, %v1833
        %v1835 = vrot.slane %v1834, 2
        %v1836 = vadd.f32 %v1834, %v1835
        %v1837 = vrot.slane %v1836, 1
        %v1838 = vadd.f32 %v1836, %v1837
        %v1839 = vadd.f32 %v1294, %v1302
        %v1840 = vadd.f32 %v1839, %v1310
        %v1841 = vadd.f32 %v1840, %v1318
        %v1842 = vadd.f32 %v1841, %v1326
        %v1843 = vadd.f32 %v1842, %v1334
        %v1844 = vsel %vm1687, %v1342, 0.0
        %v1845 = vadd.f32 %v1843, %v1844
        %v1846 = vrot.slane %v1845, 4
        %v1847 = vadd.f32 %v1845, %v1846
        %v1848 = vrot.slane %v1847, 2
        %v1849 = vadd.f32 %v1847, %v1848
        %v1850 = vrot.slane %v1849, 1
        %v1851 = vadd.f32 %v1849, %v1850
        %v1852 = vadd.f32 %v1295, %v1303
        %v1853 = vadd.f32 %v1852, %v1311
        %v1854 = vadd.f32 %v1853, %v1319
        %v1855 = vadd.f32 %v1854, %v1327
        %v1856 = vadd.f32 %v1855, %v1335
        %v1857 = vsel %vm1687, %v1343, 0.0
        %v1858 = vadd.f32 %v1856, %v1857
        %v1859 = vrot.slane %v1858, 4
        %v1860 = vadd.f32 %v1858, %v1859
        %v1861 = vrot.slane %v1860, 2
        %v1862 = vadd.f32 %v1860, %v1861
        %v1863 = vrot.slane %v1862, 1
        %v1864 = vadd.f32 %v1862, %v1863
        %v1865 = vadd.f32 %v1296, %v1304
        %v1866 = vadd.f32 %v1865, %v1312
        %v1867 = vadd.f32 %v1866, %v1320
        %v1868 = vadd.f32 %v1867, %v1328
        %v1869 = vadd.f32 %v1868, %v1336
        %v1870 = vsel %vm1687, %v1344, 0.0
        %v1871 = vadd.f32 %v1869, %v1870
        %v1872 = vrot.slane %v1871, 4
        %v1873 = vadd.f32 %v1871, %v1872
        %v1874 = vrot.slane %v1873, 2
        %v1875 = vadd.f32 %v1873, %v1874
        %v1876 = vrot.slane %v1875, 1
        %v1877 = vadd.f32 %v1875, %v1876
        %v1878 = vadd.f32 %v1297, %v1305
        %v1879 = vadd.f32 %v1878, %v1313
        %v1880 = vadd.f32 %v1879, %v1321
        %v1881 = vadd.f32 %v1880, %v1329
        %v1882 = vadd.f32 %v1881, %v1337
        %v1883 = vsel %vm1687, %v1345, 0.0
        %v1884 = vadd.f32 %v1882, %v1883
        %v1885 = vrot.slane %v1884, 4
        %v1886 = vadd.f32 %v1884, %v1885
        %v1887 = vrot.slane %v1886, 2
        %v1888 = vadd.f32 %v1886, %v1887
        %v1889 = vrot.slane %v1888, 1
        %v1890 = vadd.f32 %v1888, %v1889
        %v1891 = vadd.f32 %v1346, %v1354
        %v1892 = vadd.f32 %v1891, %v1362
        %v1893 = vadd.f32 %v1892, %v1370
        %v1894 = vadd.f32 %v1893, %v1378
        %v1895 = vadd.f32 %v1894, %v1386
        %v1896 = vsel %vm1687, %v1394, 0.0
        %v1897 = vadd.f32 %v1895, %v1896
        %v1898 = vrot.slane %v1897, 4
        %v1899 = vadd.f32 %v1897, %v1898
        %v1900 = vrot.slane %v1899, 2
        %v1901 = vadd.f32 %v1899, %v1900
        %v1902 = vrot.slane %v1901, 1
        %v1903 = vadd.f32 %v1901, %v1902
        %v1904 = vadd.f32 %v1347, %v1355
        %v1905 = vadd.f32 %v1904, %v1363
        %v1906 = vadd.f32 %v1905, %v1371
        %v1907 = vadd.f32 %v1906, %v1379
        %v1908 = vadd.f32 %v1907, %v1387
        %v1909 = vsel %vm1687, %v1395, 0.0
        %v1910 = vadd.f32 %v1908, %v1909
        %v1911 = vrot.slane %v1910, 4
        %v1912 = vadd.f32 %v1910, %v1911
        %v1913 = vrot.slane %v1912, 2
        %v1914 = vadd.f32 %v1912, %v1913
        %v1915 = vrot.slane %v1914, 1
        %v1916 = vadd.f32 %v1914, %v1915
        %v1917 = vadd.f32 %v1348, %v1356
        %v1918 = vadd.f32 %v1917, %v1364
        %v1919 = vadd.f32 %v1918, %v1372
        %v1920 = vadd.f32 %v1919, %v1380
        %v1921 = vadd.f32 %v1920, %v1388
        %v1922 = vsel %vm1687, %v1396, 0.0
        %v1923 = vadd.f32 %v1921, %v1922
        %v1924 = vrot.slane %v1923, 4
        %v1925 = vadd.f32 %v1923, %v1924
        %v1926 = vrot.slane %v1925, 2
        %v1927 = vadd.f32 %v1925, %v1926
        %v1928 = vrot.slane %v1927, 1
        %v1929 = vadd.f32 %v1927, %v1928
        %v1930 = vadd.f32 %v1349, %v1357
        %v1931 = vadd.f32 %v1930, %v1365
        %v1932 = vadd.f32 %v1931, %v1373
        %v1933 = vadd.f32 %v1932, %v1381
        %v1934 = vadd.f32 %v1933, %v1389
        %v1935 = vsel %vm1687, %v1397, 0.0
        %v1936 = vadd.f32 %v1934, %v1935
        %v1937 = vrot.slane %v1936, 4
        %v1938 = vadd.f32 %v1936, %v1937
        %v1939 = vrot.slane %v1938, 2
        %v1940 = vadd.f32 %v1938, %v1939
        %v1941 = vrot.slane %v1940, 1
        %v1942 = vadd.f32 %v1940, %v1941
        %v1943 = vadd.f32 %v1350, %v1358
        %v1944 = vadd.f32 %v1943, %v1366
        %v1945 = vadd.f32 %v1944, %v1374
        %v1946 = vadd.f32 %v1945, %v1382
        %v1947 = vadd.f32 %v1946, %v1390
        %v1948 = vsel %vm1687, %v1398, 0.0
        %v1949 = vadd.f32 %v1947, %v1948
        %v1950 = vrot.slane %v1949, 4
        %v1951 = vadd.f32 %v1949, %v1950
        %v1952 = vrot.slane %v1951, 2
        %v1953 = vadd.f32 %v1951, %v1952
        %v1954 = vrot.slane %v1953, 1
        %v1955 = vadd.f32 %v1953, %v1954
        %v1956 = vadd.f32 %v1351, %v1359
        %v1957 = vadd.f32 %v1956, %v1367
        %v1958 = vadd.f32 %v1957, %v1375
        %v1959 = vadd.f32 %v1958, %v1383
        %v1960 = vadd.f32 %v1959, %v1391
        %v1961 = vsel %vm1687, %v1399, 0.0
        %v1962 = vadd.f32 %v1960, %v1961
        %v1963 = vrot.slane %v1962, 4
        %v1964 = vadd.f32 %v1962, %v1963
        %v1965 = vrot.slane %v1964, 2
        %v1966 = vadd.f32 %v1964, %v1965
        %v1967 = vrot.slane %v1966, 1
        %v1968 = vadd.f32 %v1966, %v1967
        %v1969 = vadd.f32 %v1352, %v1360
        %v1970 = vadd.f32 %v1969, %v1368
        %v1971 = vadd.f32 %v1970, %v1376
        %v1972 = vadd.f32 %v1971, %v1384
        %v1973 = vadd.f32 %v1972, %v1392
        %v1974 = vsel %vm1687, %v1400, 0.0
        %v1975 = vadd.f32 %v1973, %v1974
        %v1976 = vrot.slane %v1975, 4
        %v1977 = vadd.f32 %v1975, %v1976
        %v1978 = vrot.slane %v1977, 2
        %v1979 = vadd.f32 %v1977, %v1978
        %v1980 = vrot.slane %v1979, 1
        %v1981 = vadd.f32 %v1979, %v1980
        %v1982 = vadd.f32 %v1353, %v1361
        %v1983 = vadd.f32 %v1982, %v1369
        %v1984 = vadd.f32 %v1983, %v1377
        %v1985 = vadd.f32 %v1984, %v1385
        %v1986 = vadd.f32 %v1985, %v1393
        %v1987 = vsel %vm1687, %v1401, 0.0
        %v1988 = vadd.f32 %v1986, %v1987
        %v1989 = vrot.slane %v1988, 4
        %v1990 = vadd.f32 %v1988, %v1989
        %v1991 = vrot.slane %v1990, 2
        %v1992 = vadd.f32 %v1990, %v1991
        %v1993 = vrot.slane %v1992, 1
        %v1994 = vadd.f32 %v1992, %v1993
        %v1995 = vadd.f32 %v1402, %v1410
        %v1996 = vadd.f32 %v1995, %v1418
        %v1997 = vadd.f32 %v1996, %v1426
        %v1998 = vadd.f32 %v1997, %v1434
        %v1999 = vadd.f32 %v1998, %v1442
        %v2000 = vsel %vm1687, %v1450, 0.0
        %v2001 = vadd.f32 %v1999, %v2000
        %v2002 = vrot.slane %v2001, 4
        %v2003 = vadd.f32 %v2001, %v2002
        %v2004 = vrot.slane %v2003, 2
        %v2005 = vadd.f32 %v2003, %v2004
        %v2006 = vrot.slane %v2005, 1
        %v2007 = vadd.f32 %v2005, %v2006
        %v2008 = vadd.f32 %v1403, %v1411
        %v2009 = vadd.f32 %v2008, %v1419
        %v2010 = vadd.f32 %v2009, %v1427
        %v2011 = vadd.f32 %v2010, %v1435
        %v2012 = vadd.f32 %v2011, %v1443
        %v2013 = vsel %vm1687, %v1451, 0.0
        %v2014 = vadd.f32 %v2012, %v2013
        %v2015 = vrot.slane %v2014, 4
        %v2016 = vadd.f32 %v2014, %v2015
        %v2017 = vrot.slane %v2016, 2
        %v2018 = vadd.f32 %v2016, %v2017
        %v2019 = vrot.slane %v2018, 1
        %v2020 = vadd.f32 %v2018, %v2019
        %v2021 = vadd.f32 %v1404, %v1412
        %v2022 = vadd.f32 %v2021, %v1420
        %v2023 = vadd.f32 %v2022, %v1428
        %v2024 = vadd.f32 %v2023, %v1436
        %v2025 = vadd.f32 %v2024, %v1444
        %v2026 = vsel %vm1687, %v1452, 0.0
        %v2027 = vadd.f32 %v2025, %v2026
        %v2028 = vrot.slane %v2027, 4
        %v2029 = vadd.f32 %v2027, %v2028
        %v2030 = vrot.slane %v2029, 2
        %v2031 = vadd.f32 %v2029, %v2030
        %v2032 = vrot.slane %v2031, 1
        %v2033 = vadd.f32 %v2031, %v2032
        %v2034 = vadd.f32 %v1405, %v1413
        %v2035 = vadd.f32 %v2034, %v1421
        %v2036 = vadd.f32 %v2035, %v1429
        %v2037 = vadd.f32 %v2036, %v1437
        %v2038 = vadd.f32 %v2037, %v1445
        %v2039 = vsel %vm1687, %v1453, 0.0
        %v2040 = vadd.f32 %v2038, %v2039
        %v2041 = vrot.slane %v2040, 4
        %v2042 = vadd.f32 %v2040, %v2041
        %v2043 = vrot.slane %v2042, 2
        %v2044 = vadd.f32 %v2042, %v2043
        %v2045 = vrot.slane %v2044, 1
        %v2046 = vadd.f32 %v2044, %v2045
        %v2047 = vadd.f32 %v1406, %v1414
        %v2048 = vadd.f32 %v2047, %v1422
        %v2049 = vadd.f32 %v2048, %v1430
        %v2050 = vadd.f32 %v2049, %v1438
        %v2051 = vadd.f32 %v2050, %v1446
        %v2052 = vsel %vm1687, %v1454, 0.0
        %v2053 = vadd.f32 %v2051, %v2052
        %v2054 = vrot.slane %v2053, 4
        %v2055 = vadd.f32 %v2053, %v2054
        %v2056 = vrot.slane %v2055, 2
        %v2057 = vadd.f32 %v2055, %v2056
        %v2058 = vrot.slane %v2057, 1
        %v2059 = vadd.f32 %v2057, %v2058
        %v2060 = vadd.f32 %v1407, %v1415
        %v2061 = vadd.f32 %v2060, %v1423
        %v2062 = vadd.f32 %v2061, %v1431
        %v2063 = vadd.f32 %v2062, %v1439
        %v2064 = vadd.f32 %v2063, %v1447
        %v2065 = vsel %vm1687, %v1455, 0.0
        %v2066 = vadd.f32 %v2064, %v2065
        %v2067 = vrot.slane %v2066, 4
        %v2068 = vadd.f32 %v2066, %v2067
        %v2069 = vrot.slane %v2068, 2
        %v2070 = vadd.f32 %v2068, %v2069
        %v2071 = vrot.slane %v2070, 1
        %v2072 = vadd.f32 %v2070, %v2071
        %v2073 = vadd.f32 %v1408, %v1416
        %v2074 = vadd.f32 %v2073, %v1424
        %v2075 = vadd.f32 %v2074, %v1432
        %v2076 = vadd.f32 %v2075, %v1440
        %v2077 = vadd.f32 %v2076, %v1448
        %v2078 = vsel %vm1687, %v1456, 0.0
        %v2079 = vadd.f32 %v2077, %v2078
        %v2080 = vrot.slane %v2079, 4
        %v2081 = vadd.f32 %v2079, %v2080
        %v2082 = vrot.slane %v2081, 2
        %v2083 = vadd.f32 %v2081, %v2082
        %v2084 = vrot.slane %v2083, 1
        %v2085 = vadd.f32 %v2083, %v2084
        %v2086 = vadd.f32 %v1409, %v1417
        %v2087 = vadd.f32 %v2086, %v1425
        %v2088 = vadd.f32 %v2087, %v1433
        %v2089 = vadd.f32 %v2088, %v1441
        %v2090 = vadd.f32 %v2089, %v1449
        %v2091 = vsel %vm1687, %v1457, 0.0
        %v2092 = vadd.f32 %v2090, %v2091
        %v2093 = vrot.slane %v2092, 4
        %v2094 = vadd.f32 %v2092, %v2093
        %v2095 = vrot.slane %v2094, 2
        %v2096 = vadd.f32 %v2094, %v2095
        %v2097 = vrot.slane %v2096, 1
        %v2098 = vadd.f32 %v2096, %v2097
        %v2099 = vadd.f32 %v1458, %v1466
        %v2100 = vadd.f32 %v2099, %v1474
        %v2101 = vadd.f32 %v2100, %v1482
        %v2102 = vadd.f32 %v2101, %v1490
        %v2103 = vadd.f32 %v2102, %v1498
        %v2104 = vsel %vm1687, %v1506, 0.0
        %v2105 = vadd.f32 %v2103, %v2104
        %v2106 = vrot.slane %v2105, 4
        %v2107 = vadd.f32 %v2105, %v2106
        %v2108 = vrot.slane %v2107, 2
        %v2109 = vadd.f32 %v2107, %v2108
        %v2110 = vrot.slane %v2109, 1
        %v2111 = vadd.f32 %v2109, %v2110
        %v2112 = vadd.f32 %v1459, %v1467
        %v2113 = vadd.f32 %v2112, %v1475
        %v2114 = vadd.f32 %v2113, %v1483
        %v2115 = vadd.f32 %v2114, %v1491
        %v2116 = vadd.f32 %v2115, %v1499
        %v2117 = vsel %vm1687, %v1507, 0.0
        %v2118 = vadd.f32 %v2116, %v2117
        %v2119 = vrot.slane %v2118, 4
        %v2120 = vadd.f32 %v2118, %v2119
        %v2121 = vrot.slane %v2120, 2
        %v2122 = vadd.f32 %v2120, %v2121
        %v2123 = vrot.slane %v2122, 1
        %v2124 = vadd.f32 %v2122, %v2123
        %v2125 = vadd.f32 %v1460, %v1468
        %v2126 = vadd.f32 %v2125, %v1476
        %v2127 = vadd.f32 %v2126, %v1484
        %v2128 = vadd.f32 %v2127, %v1492
        %v2129 = vadd.f32 %v2128, %v1500
        %v2130 = vsel %vm1687, %v1508, 0.0
        %v2131 = vadd.f32 %v2129, %v2130
        %v2132 = vrot.slane %v2131, 4
        %v2133 = vadd.f32 %v2131, %v2132
        %v2134 = vrot.slane %v2133, 2
        %v2135 = vadd.f32 %v2133, %v2134
        %v2136 = vrot.slane %v2135, 1
        %v2137 = vadd.f32 %v2135, %v2136
        %v2138 = vadd.f32 %v1461, %v1469
        %v2139 = vadd.f32 %v2138, %v1477
        %v2140 = vadd.f32 %v2139, %v1485
        %v2141 = vadd.f32 %v2140, %v1493
        %v2142 = vadd.f32 %v2141, %v1501
        %v2143 = vsel %vm1687, %v1509, 0.0
        %v2144 = vadd.f32 %v2142, %v2143
        %v2145 = vrot.slane %v2144, 4
        %v2146 = vadd.f32 %v2144, %v2145
        %v2147 = vrot.slane %v2146, 2
        %v2148 = vadd.f32 %v2146, %v2147
        %v2149 = vrot.slane %v2148, 1
        %v2150 = vadd.f32 %v2148, %v2149
        %v2151 = vadd.f32 %v1462, %v1470
        %v2152 = vadd.f32 %v2151, %v1478
        %v2153 = vadd.f32 %v2152, %v1486
        %v2154 = vadd.f32 %v2153, %v1494
        %v2155 = vadd.f32 %v2154, %v1502
        %v2156 = vsel %vm1687, %v1510, 0.0
        %v2157 = vadd.f32 %v2155, %v2156
        %v2158 = vrot.slane %v2157, 4
        %v2159 = vadd.f32 %v2157, %v2158
        %v2160 = vrot.slane %v2159, 2
        %v2161 = vadd.f32 %v2159, %v2160
        %v2162 = vrot.slane %v2161, 1
        %v2163 = vadd.f32 %v2161, %v2162
        %v2164 = vadd.f32 %v1463, %v1471
        %v2165 = vadd.f32 %v2164, %v1479
        %v2166 = vadd.f32 %v2165, %v1487
        %v2167 = vadd.f32 %v2166, %v1495
        %v2168 = vadd.f32 %v2167, %v1503
        %v2169 = vsel %vm1687, %v1511, 0.0
        %v2170 = vadd.f32 %v2168, %v2169
        %v2171 = vrot.slane %v2170, 4
        %v2172 = vadd.f32 %v2170, %v2171
        %v2173 = vrot.slane %v2172, 2
        %v2174 = vadd.f32 %v2172, %v2173
        %v2175 = vrot.slane %v2174, 1
        %v2176 = vadd.f32 %v2174, %v2175
        %v2177 = vadd.f32 %v1464, %v1472
        %v2178 = vadd.f32 %v2177, %v1480
        %v2179 = vadd.f32 %v2178, %v1488
        %v2180 = vadd.f32 %v2179, %v1496
        %v2181 = vadd.f32 %v2180, %v1504
        %v2182 = vsel %vm1687, %v1512, 0.0
        %v2183 = vadd.f32 %v2181, %v2182
        %v2184 = vrot.slane %v2183, 4
        %v2185 = vadd.f32 %v2183, %v2184
        %v2186 = vrot.slane %v2185, 2
        %v2187 = vadd.f32 %v2185, %v2186
        %v2188 = vrot.slane %v2187, 1
        %v2189 = vadd.f32 %v2187, %v2188
        %v2190 = vadd.f32 %v1465, %v1473
        %v2191 = vadd.f32 %v2190, %v1481
        %v2192 = vadd.f32 %v2191, %v1489
        %v2193 = vadd.f32 %v2192, %v1497
        %v2194 = vadd.f32 %v2193, %v1505
        %v2195 = vsel %vm1687, %v1513, 0.0
        %v2196 = vadd.f32 %v2194, %v2195
        %v2197 = vrot.slane %v2196, 4
        %v2198 = vadd.f32 %v2196, %v2197
        %v2199 = vrot.slane %v2198, 2
        %v2200 = vadd.f32 %v2198, %v2199
        %v2201 = vrot.slane %v2200, 1
        %v2202 = vadd.f32 %v2200, %v2201
        %v2203 = vadd.f32 %v1514, %v1522
        %v2204 = vadd.f32 %v2203, %v1530
        %v2205 = vadd.f32 %v2204, %v1538
        %v2206 = vadd.f32 %v2205, %v1546
        %v2207 = vadd.f32 %v2206, %v1554
        %v2208 = vsel %vm1687, %v1562, 0.0
        %v2209 = vadd.f32 %v2207, %v2208
        %v2210 = vrot.slane %v2209, 4
        %v2211 = vadd.f32 %v2209, %v2210
        %v2212 = vrot.slane %v2211, 2
        %v2213 = vadd.f32 %v2211, %v2212
        %v2214 = vrot.slane %v2213, 1
        %v2215 = vadd.f32 %v2213, %v2214
        %v2216 = vadd.f32 %v1515, %v1523
        %v2217 = vadd.f32 %v2216, %v1531
        %v2218 = vadd.f32 %v2217, %v1539
        %v2219 = vadd.f32 %v2218, %v1547
        %v2220 = vadd.f32 %v2219, %v1555
        %v2221 = vsel %vm1687, %v1563, 0.0
        %v2222 = vadd.f32 %v2220, %v2221
        %v2223 = vrot.slane %v2222, 4
        %v2224 = vadd.f32 %v2222, %v2223
        %v2225 = vrot.slane %v2224, 2
        %v2226 = vadd.f32 %v2224, %v2225
        %v2227 = vrot.slane %v2226, 1
        %v2228 = vadd.f32 %v2226, %v2227
        %v2229 = vadd.f32 %v1516, %v1524
        %v2230 = vadd.f32 %v2229, %v1532
        %v2231 = vadd.f32 %v2230, %v1540
        %v2232 = vadd.f32 %v2231, %v1548
        %v2233 = vadd.f32 %v2232, %v1556
        %v2234 = vsel %vm1687, %v1564, 0.0
        %v2235 = vadd.f32 %v2233, %v2234
        %v2236 = vrot.slane %v2235, 4
        %v2237 = vadd.f32 %v2235, %v2236
        %v2238 = vrot.slane %v2237, 2
        %v2239 = vadd.f32 %v2237, %v2238
        %v2240 = vrot.slane %v2239, 1
        %v2241 = vadd.f32 %v2239, %v2240
        %v2242 = vadd.f32 %v1517, %v1525
        %v2243 = vadd.f32 %v2242, %v1533
        %v2244 = vadd.f32 %v2243, %v1541
        %v2245 = vadd.f32 %v2244, %v1549
        %v2246 = vadd.f32 %v2245, %v1557
        %v2247 = vsel %vm1687, %v1565, 0.0
        %v2248 = vadd.f32 %v2246, %v2247
        %v2249 = vrot.slane %v2248, 4
        %v2250 = vadd.f32 %v2248, %v2249
        %v2251 = vrot.slane %v2250, 2
        %v2252 = vadd.f32 %v2250, %v2251
        %v2253 = vrot.slane %v2252, 1
        %v2254 = vadd.f32 %v2252, %v2253
        %v2255 = vadd.f32 %v1518, %v1526
        %v2256 = vadd.f32 %v2255, %v1534
        %v2257 = vadd.f32 %v2256, %v1542
        %v2258 = vadd.f32 %v2257, %v1550
        %v2259 = vadd.f32 %v2258, %v1558
        %v2260 = vsel %vm1687, %v1566, 0.0
        %v2261 = vadd.f32 %v2259, %v2260
        %v2262 = vrot.slane %v2261, 4
        %v2263 = vadd.f32 %v2261, %v2262
        %v2264 = vrot.slane %v2263, 2
        %v2265 = vadd.f32 %v2263, %v2264
        %v2266 = vrot.slane %v2265, 1
        %v2267 = vadd.f32 %v2265, %v2266
        %v2268 = vadd.f32 %v1519, %v1527
        %v2269 = vadd.f32 %v2268, %v1535
        %v2270 = vadd.f32 %v2269, %v1543
        %v2271 = vadd.f32 %v2270, %v1551
        %v2272 = vadd.f32 %v2271, %v1559
        %v2273 = vsel %vm1687, %v1567, 0.0
        %v2274 = vadd.f32 %v2272, %v2273
        %v2275 = vrot.slane %v2274, 4
        %v2276 = vadd.f32 %v2274, %v2275
        %v2277 = vrot.slane %v2276, 2
        %v2278 = vadd.f32 %v2276, %v2277
        %v2279 = vrot.slane %v2278, 1
        %v2280 = vadd.f32 %v2278, %v2279
        %v2281 = vadd.f32 %v1520, %v1528
        %v2282 = vadd.f32 %v2281, %v1536
        %v2283 = vadd.f32 %v2282, %v1544
        %v2284 = vadd.f32 %v2283, %v1552
        %v2285 = vadd.f32 %v2284, %v1560
        %v2286 = vsel %vm1687, %v1568, 0.0
        %v2287 = vadd.f32 %v2285, %v2286
        %v2288 = vrot.slane %v2287, 4
        %v2289 = vadd.f32 %v2287, %v2288
        %v2290 = vrot.slane %v2289, 2
        %v2291 = vadd.f32 %v2289, %v2290
        %v2292 = vrot.slane %v2291, 1
        %v2293 = vadd.f32 %v2291, %v2292
        %v2294 = vadd.f32 %v1521, %v1529
        %v2295 = vadd.f32 %v2294, %v1537
        %v2296 = vadd.f32 %v2295, %v1545
        %v2297 = vadd.f32 %v2296, %v1553
        %v2298 = vadd.f32 %v2297, %v1561
        %v2299 = vsel %vm1687, %v1569, 0.0
        %v2300 = vadd.f32 %v2298, %v2299
        %v2301 = vrot.slane %v2300, 4
        %v2302 = vadd.f32 %v2300, %v2301
        %v2303 = vrot.slane %v2302, 2
        %v2304 = vadd.f32 %v2302, %v2303
        %v2305 = vrot.slane %v2304, 1
        %v2306 = vadd.f32 %v2304, %v2305
        %v2307 = vadd.f32 %v1570, %v1578
        %v2308 = vadd.f32 %v2307, %v1586
        %v2309 = vadd.f32 %v2308, %v1594
        %v2310 = vadd.f32 %v2309, %v1602
        %v2311 = vadd.f32 %v2310, %v1610
        %v2312 = vsel %vm1687, %v1618, 0.0
        %v2313 = vadd.f32 %v2311, %v2312
        %v2314 = vrot.slane %v2313, 4
        %v2315 = vadd.f32 %v2313, %v2314
        %v2316 = vrot.slane %v2315, 2
        %v2317 = vadd.f32 %v2315, %v2316
        %v2318 = vrot.slane %v2317, 1
        %v2319 = vadd.f32 %v2317, %v2318
        %v2320 = vadd.f32 %v1571, %v1579
        %v2321 = vadd.f32 %v2320, %v1587
        %v2322 = vadd.f32 %v2321, %v1595
        %v2323 = vadd.f32 %v2322, %v1603
        %v2324 = vadd.f32 %v2323, %v1611
        %v2325 = vsel %vm1687, %v1619, 0.0
        %v2326 = vadd.f32 %v2324, %v2325
        %v2327 = vrot.slane %v2326, 4
        %v2328 = vadd.f32 %v2326, %v2327
        %v2329 = vrot.slane %v2328, 2
        %v2330 = vadd.f32 %v2328, %v2329
        %v2331 = vrot.slane %v2330, 1
        %v2332 = vadd.f32 %v2330, %v2331
        %v2333 = vadd.f32 %v1572, %v1580
        %v2334 = vadd.f32 %v2333, %v1588
        %v2335 = vadd.f32 %v2334, %v1596
        %v2336 = vadd.f32 %v2335, %v1604
        %v2337 = vadd.f32 %v2336, %v1612
        %v2338 = vsel %vm1687, %v1620, 0.0
        %v2339 = vadd.f32 %v2337, %v2338
        %v2340 = vrot.slane %v2339, 4
        %v2341 = vadd.f32 %v2339, %v2340
        %v2342 = vrot.slane %v2341, 2
        %v2343 = vadd.f32 %v2341, %v2342
        %v2344 = vrot.slane %v2343, 1
        %v2345 = vadd.f32 %v2343, %v2344
        %v2346 = vadd.f32 %v1573, %v1581
        %v2347 = vadd.f32 %v2346, %v1589
        %v2348 = vadd.f32 %v2347, %v1597
        %v2349 = vadd.f32 %v2348, %v1605
        %v2350 = vadd.f32 %v2349, %v1613
        %v2351 = vsel %vm1687, %v1621, 0.0
        %v2352 = vadd.f32 %v2350, %v2351
        %v2353 = vrot.slane %v2352, 4
        %v2354 = vadd.f32 %v2352, %v2353
        %v2355 = vrot.slane %v2354, 2
        %v2356 = vadd.f32 %v2354, %v2355
        %v2357 = vrot.slane %v2356, 1
        %v2358 = vadd.f32 %v2356, %v2357
        %v2359 = vadd.f32 %v1574, %v1582
        %v2360 = vadd.f32 %v2359, %v1590
        %v2361 = vadd.f32 %v2360, %v1598
        %v2362 = vadd.f32 %v2361, %v1606
        %v2363 = vadd.f32 %v2362, %v1614
        %v2364 = vsel %vm1687, %v1622, 0.0
        %v2365 = vadd.f32 %v2363, %v2364
        %v2366 = vrot.slane %v2365, 4
        %v2367 = vadd.f32 %v2365, %v2366
        %v2368 = vrot.slane %v2367, 2
        %v2369 = vadd.f32 %v2367, %v2368
        %v2370 = vrot.slane %v2369, 1
        %v2371 = vadd.f32 %v2369, %v2370
        %v2372 = vadd.f32 %v1575, %v1583
        %v2373 = vadd.f32 %v2372, %v1591
        %v2374 = vadd.f32 %v2373, %v1599
        %v2375 = vadd.f32 %v2374, %v1607
        %v2376 = vadd.f32 %v2375, %v1615
        %v2377 = vsel %vm1687, %v1623, 0.0
        %v2378 = vadd.f32 %v2376, %v2377
        %v2379 = vrot.slane %v2378, 4
        %v2380 = vadd.f32 %v2378, %v2379
        %v2381 = vrot.slane %v2380, 2
        %v2382 = vadd.f32 %v2380, %v2381
        %v2383 = vrot.slane %v2382, 1
        %v2384 = vadd.f32 %v2382, %v2383
        %v2385 = vadd.f32 %v1576, %v1584
        %v2386 = vadd.f32 %v2385, %v1592
        %v2387 = vadd.f32 %v2386, %v1600
        %v2388 = vadd.f32 %v2387, %v1608
        %v2389 = vadd.f32 %v2388, %v1616
        %v2390 = vsel %vm1687, %v1624, 0.0
        %v2391 = vadd.f32 %v2389, %v2390
        %v2392 = vrot.slane %v2391, 4
        %v2393 = vadd.f32 %v2391, %v2392
        %v2394 = vrot.slane %v2393, 2
        %v2395 = vadd.f32 %v2393, %v2394
        %v2396 = vrot.slane %v2395, 1
        %v2397 = vadd.f32 %v2395, %v2396
        %v2398 = vadd.f32 %v1577, %v1585
        %v2399 = vadd.f32 %v2398, %v1593
        %v2400 = vadd.f32 %v2399, %v1601
        %v2401 = vadd.f32 %v2400, %v1609
        %v2402 = vadd.f32 %v2401, %v1617
        %v2403 = vsel %vm1687, %v1625, 0.0
        %v2404 = vadd.f32 %v2402, %v2403
        %v2405 = vrot.slane %v2404, 4
        %v2406 = vadd.f32 %v2404, %v2405
        %v2407 = vrot.slane %v2406, 2
        %v2408 = vadd.f32 %v2406, %v2407
        %v2409 = vrot.slane %v2408, 1
        %v2410 = vadd.f32 %v2408, %v2409
        %v2411 = vadd.f32 %v1626, %v1634
        %v2412 = vadd.f32 %v2411, %v1642
        %v2413 = vadd.f32 %v2412, %v1650
        %v2414 = vadd.f32 %v2413, %v1658
        %v2415 = vadd.f32 %v2414, %v1666
        %v2416 = vsel %vm1687, %v1674, 0.0
        %v2417 = vadd.f32 %v2415, %v2416
        %v2418 = vrot.slane %v2417, 4
        %v2419 = vadd.f32 %v2417, %v2418
        %v2420 = vrot.slane %v2419, 2
        %v2421 = vadd.f32 %v2419, %v2420
        %v2422 = vrot.slane %v2421, 1
        %v2423 = vadd.f32 %v2421, %v2422
        %v2424 = vadd.f32 %v1627, %v1635
        %v2425 = vadd.f32 %v2424, %v1643
        %v2426 = vadd.f32 %v2425, %v1651
        %v2427 = vadd.f32 %v2426, %v1659
        %v2428 = vadd.f32 %v2427, %v1667
        %v2429 = vsel %vm1687, %v1675, 0.0
        %v2430 = vadd.f32 %v2428, %v2429
        %v2431 = vrot.slane %v2430, 4
        %v2432 = vadd.f32 %v2430, %v2431
        %v2433 = vrot.slane %v2432, 2
        %v2434 = vadd.f32 %v2432, %v2433
        %v2435 = vrot.slane %v2434, 1
        %v2436 = vadd.f32 %v2434, %v2435
        %v2437 = vadd.f32 %v1628, %v1636
        %v2438 = vadd.f32 %v2437, %v1644
        %v2439 = vadd.f32 %v2438, %v1652
        %v2440 = vadd.f32 %v2439, %v1660
        %v2441 = vadd.f32 %v2440, %v1668
        %v2442 = vsel %vm1687, %v1676, 0.0
        %v2443 = vadd.f32 %v2441, %v2442
        %v2444 = vrot.slane %v2443, 4
        %v2445 = vadd.f32 %v2443, %v2444
        %v2446 = vrot.slane %v2445, 2
        %v2447 = vadd.f32 %v2445, %v2446
        %v2448 = vrot.slane %v2447, 1
        %v2449 = vadd.f32 %v2447, %v2448
        %v2450 = vadd.f32 %v1629, %v1637
        %v2451 = vadd.f32 %v2450, %v1645
        %v2452 = vadd.f32 %v2451, %v1653
        %v2453 = vadd.f32 %v2452, %v1661
        %v2454 = vadd.f32 %v2453, %v1669
        %v2455 = vsel %vm1687, %v1677, 0.0
        %v2456 = vadd.f32 %v2454, %v2455
        %v2457 = vrot.slane %v2456, 4
        %v2458 = vadd.f32 %v2456, %v2457
        %v2459 = vrot.slane %v2458, 2
        %v2460 = vadd.f32 %v2458, %v2459
        %v2461 = vrot.slane %v2460, 1
        %v2462 = vadd.f32 %v2460, %v2461
        %v2463 = vadd.f32 %v1630, %v1638
        %v2464 = vadd.f32 %v2463, %v1646
        %v2465 = vadd.f32 %v2464, %v1654
        %v2466 = vadd.f32 %v2465, %v1662
        %v2467 = vadd.f32 %v2466, %v1670
        %v2468 = vsel %vm1687, %v1678, 0.0
        %v2469 = vadd.f32 %v2467, %v2468
        %v2470 = vrot.slane %v2469, 4
        %v2471 = vadd.f32 %v2469, %v2470
        %v2472 = vrot.slane %v2471, 2
        %v2473 = vadd.f32 %v2471, %v2472
        %v2474 = vrot.slane %v2473, 1
        %v2475 = vadd.f32 %v2473, %v2474
        %v2476 = vadd.f32 %v1631, %v1639
        %v2477 = vadd.f32 %v2476, %v1647
        %v2478 = vadd.f32 %v2477, %v1655
        %v2479 = vadd.f32 %v2478, %v1663
        %v2480 = vadd.f32 %v2479, %v1671
        %v2481 = vsel %vm1687, %v1679, 0.0
        %v2482 = vadd.f32 %v2480, %v2481
        %v2483 = vrot.slane %v2482, 4
        %v2484 = vadd.f32 %v2482, %v2483
        %v2485 = vrot.slane %v2484, 2
        %v2486 = vadd.f32 %v2484, %v2485
        %v2487 = vrot.slane %v2486, 1
        %v2488 = vadd.f32 %v2486, %v2487
        %v2489 = vadd.f32 %v1632, %v1640
        %v2490 = vadd.f32 %v2489, %v1648
        %v2491 = vadd.f32 %v2490, %v1656
        %v2492 = vadd.f32 %v2491, %v1664
        %v2493 = vadd.f32 %v2492, %v1672
        %v2494 = vsel %vm1687, %v1680, 0.0
        %v2495 = vadd.f32 %v2493, %v2494
        %v2496 = vrot.slane %v2495, 4
        %v2497 = vadd.f32 %v2495, %v2496
        %v2498 = vrot.slane %v2497, 2
        %v2499 = vadd.f32 %v2497, %v2498
        %v2500 = vrot.slane %v2499, 1
        %v2501 = vadd.f32 %v2499, %v2500
        %v2502 = vadd.f32 %v1633, %v1641
        %v2503 = vadd.f32 %v2502, %v1649
        %v2504 = vadd.f32 %v2503, %v1657
        %v2505 = vadd.f32 %v2504, %v1665
        %v2506 = vadd.f32 %v2505, %v1673
        %v2507 = vsel %vm1687, %v1681, 0.0
        %v2508 = vadd.f32 %v2506, %v2507
        %v2509 = vrot.slane %v2508, 4
        %v2510 = vadd.f32 %v2508, %v2509
        %v2511 = vrot.slane %v2510, 2
        %v2512 = vadd.f32 %v2510, %v2511
        %v2513 = vrot.slane %v2512, 1
        %v2514 = vadd.f32 %v2512, %v2513
        %v2515 = vmul.f32 %v1695, 0.020408163
        %v2516 = vmul.f32 %v1708, 0.020408163
        %v2517 = vmul.f32 %v1721, 0.020408163
        %v2518 = vmul.f32 %v1734, 0.020408163
        %v2519 = vmul.f32 %v1747, 0.020408163
        %v2520 = vmul.f32 %v1760, 0.020408163
        %v2521 = vmul.f32 %v1773, 0.020408163
        %v2522 = vmul.f32 %v1786, 0.020408163
        %v2523 = vmul.f32 %v1799, 0.020408163
        %v2524 = vmul.f32 %v1812, 0.020408163
        %v2525 = vmul.f32 %v1825, 0.020408163
        %v2526 = vmul.f32 %v1838, 0.020408163
        %v2527 = vmul.f32 %v1851, 0.020408163
        %v2528 = vmul.f32 %v1864, 0.020408163
        %v2529 = vmul.f32 %v1877, 0.020408163
        %v2530 = vmul.f32 %v1890, 0.020408163
        %v2531 = vmul.f32 %v1903, 0.020408163
        %v2532 = vmul.f32 %v1916, 0.020408163
        %v2533 = vmul.f32 %v1929, 0.020408163
        %v2534 = vmul.f32 %v1942, 0.020408163
        %v2535 = vmul.f32 %v1955, 0.020408163
        %v2536 = vmul.f32 %v1968, 0.020408163
        %v2537 = vmul.f32 %v1981, 0.020408163
        %v2538 = vmul.f32 %v1994, 0.020408163
        %v2539 = vmul.f32 %v2007, 0.020408163
        %v2540 = vmul.f32 %v2020, 0.020408163
        %v2541 = vmul.f32 %v2033, 0.020408163
        %v2542 = vmul.f32 %v2046, 0.020408163
        %v2543 = vmul.f32 %v2059, 0.020408163
        %v2544 = vmul.f32 %v2072, 0.020408163
        %v2545 = vmul.f32 %v2085, 0.020408163
        %v2546 = vmul.f32 %v2098, 0.020408163
        %v2547 = vmul.f32 %v2111, 0.020408163
        %v2548 = vmul.f32 %v2124, 0.020408163
        %v2549 = vmul.f32 %v2137, 0.020408163
        %v2550 = vmul.f32 %v2150, 0.020408163
        %v2551 = vmul.f32 %v2163, 0.020408163
        %v2552 = vmul.f32 %v2176, 0.020408163
        %v2553 = vmul.f32 %v2189, 0.020408163
        %v2554 = vmul.f32 %v2202, 0.020408163
        %v2555 = vmul.f32 %v2215, 0.020408163
        %v2556 = vmul.f32 %v2228, 0.020408163
        %v2557 = vmul.f32 %v2241, 0.020408163
        %v2558 = vmul.f32 %v2254, 0.020408163
        %v2559 = vmul.f32 %v2267, 0.020408163
        %v2560 = vmul.f32 %v2280, 0.020408163
        %v2561 = vmul.f32 %v2293, 0.020408163
        %v2562 = vmul.f32 %v2306, 0.020408163
        %v2563 = vmul.f32 %v2319, 0.020408163
        %v2564 = vmul.f32 %v2332, 0.020408163
        %v2565 = vmul.f32 %v2345, 0.020408163
        %v2566 = vmul.f32 %v2358, 0.020408163
        %v2567 = vmul.f32 %v2371, 0.020408163
        %v2568 = vmul.f32 %v2384, 0.020408163
        %v2569 = vmul.f32 %v2397, 0.020408163
        %v2570 = vmul.f32 %v2410, 0.020408163
        %v2571 = vmul.f32 %v2423, 0.020408163
        %v2572 = vmul.f32 %v2436, 0.020408163
        %v2573 = vmul.f32 %v2449, 0.020408163
        %v2574 = vmul.f32 %v2462, 0.020408163
        %v2575 = vmul.f32 %v2475, 0.020408163
        %v2576 = vmul.f32 %v2488, 0.020408163
        %v2577 = vmul.f32 %v2501, 0.020408163
        %v2578 = vmul.f32 %v2514, 0.020408163
        %v2579 = vld [vmem:[%s2] sm:$0xff]
        %v2580 = vld [vmem:[%s2 + $0x8] sm:$0xff]
        %v2581 = vld [vmem:[%s2 + $0x10] sm:$0xff]
        %v2582 = vld [vmem:[%s2 + $0x18] sm:$0xff]
        %v2583 = vld [vmem:[%s2 + $0x20] sm:$0xff]
        %v2584 = vld [vmem:[%s2 + $0x28] sm:$0xff]
        %v2585 = vld [vmem:[%s2 + $0x30] sm:$0xff]
        %v2586 = vld [vmem:[%s2 + $0x38] sm:$0xff]
        %v2587 = vld [vmem:[%s2 + $0x40] sm:$0xff]
        %v2588 = vld [vmem:[%s2 + $0x48] sm:$0xff]
        %v2589 = vld [vmem:[%s2 + $0x50] sm:$0xff]
        %v2590 = vld [vmem:[%s2 + $0x58] sm:$0xff]
        %v2591 = vld [vmem:[%s2 + $0x60] sm:$0xff]
        %v2592 = vld [vmem:[%s2 + $0x68] sm:$0xff]
        %v2593 = vld [vmem:[%s2 + $0x70] sm:$0xff]
        %v2594 = vld [vmem:[%s2 + $0x78] sm:$0xff]
        %v2595 = vld [vmem:[%s2 + $0x80] sm:$0xff]
        %v2596 = vld [vmem:[%s2 + $0x88] sm:$0xff]
        %v2597 = vld [vmem:[%s2 + $0x90] sm:$0xff]
        %v2598 = vld [vmem:[%s2 + $0x98] sm:$0xff]
        %v2599 = vld [vmem:[%s2 + $0xa0] sm:$0xff]
        %v2600 = vld [vmem:[%s2 + $0xa8] sm:$0xff]
        %v2601 = vld [vmem:[%s2 + $0xb0] sm:$0xff]
        %v2602 = vld [vmem:[%s2 + $0xb8] sm:$0xff]
        %v2603 = vld [vmem:[%s2 + $0xc0] sm:$0xff]
        %v2604 = vld [vmem:[%s2 + $0xc8] sm:$0xff]
        %v2605 = vld [vmem:[%s2 + $0xd0] sm:$0xff]
        %v2606 = vld [vmem:[%s2 + $0xd8] sm:$0xff]
        %v2607 = vld [vmem:[%s2 + $0xe0] sm:$0xff]
        %v2608 = vld [vmem:[%s2 + $0xe8] sm:$0xff]
        %v2609 = vld [vmem:[%s2 + $0xf0] sm:$0xff]
        %v2610 = vld [vmem:[%s2 + $0xf8] sm:$0xff]
        %v2611 = vld [vmem:[%s2 + $0x100] sm:$0xff]
        %v2612 = vld [vmem:[%s2 + $0x108] sm:$0xff]
        %v2613 = vld [vmem:[%s2 + $0x110] sm:$0xff]
        %v2614 = vld [vmem:[%s2 + $0x118] sm:$0xff]
        %v2615 = vld [vmem:[%s2 + $0x120] sm:$0xff]
        %v2616 = vld [vmem:[%s2 + $0x128] sm:$0xff]
        %v2617 = vld [vmem:[%s2 + $0x130] sm:$0xff]
        %v2618 = vld [vmem:[%s2 + $0x138] sm:$0xff]
        %v2619 = vld [vmem:[%s2 + $0x140] sm:$0xff]
        %v2620 = vld [vmem:[%s2 + $0x148] sm:$0xff]
        %v2621 = vld [vmem:[%s2 + $0x150] sm:$0xff]
        %v2622 = vld [vmem:[%s2 + $0x158] sm:$0xff]
        %v2623 = vld [vmem:[%s2 + $0x160] sm:$0xff]
        %v2624 = vld [vmem:[%s2 + $0x168] sm:$0xff]
        %v2625 = vld [vmem:[%s2 + $0x170] sm:$0xff]
        %v2626 = vld [vmem:[%s2 + $0x178] sm:$0xff]
        %v2627 = vld [vmem:[%s2 + $0x180] sm:$0xff]
        %v2628 = vld [vmem:[%s2 + $0x188] sm:$0xff]
        %v2629 = vld [vmem:[%s2 + $0x190] sm:$0xff]
        %v2630 = vld [vmem:[%s2 + $0x198] sm:$0xff]
        %v2631 = vld [vmem:[%s2 + $0x1a0] sm:$0xff]
        %v2632 = vld [vmem:[%s2 + $0x1a8] sm:$0xff]
        %v2633 = vld [vmem:[%s2 + $0x1b0] sm:$0xff]
        %v2634 = vld [vmem:[%s2 + $0x1b8] sm:$0xff]
        %v2635 = vld [vmem:[%s2 + $0x1c0] sm:$0xff]
        %v2636 = vld [vmem:[%s2 + $0x1c8] sm:$0xff]
        %v2637 = vld [vmem:[%s2 + $0x1d0] sm:$0xff]
        %v2638 = vld [vmem:[%s2 + $0x1d8] sm:$0xff]
        %v2639 = vld [vmem:[%s2 + $0x1e0] sm:$0xff]
        %v2640 = vld [vmem:[%s2 + $0x1e8] sm:$0xff]
        %v2641 = vld [vmem:[%s2 + $0x1f0] sm:$0xff]
        %v2642 = vld [vmem:[%s2 + $0x1f8] sm:$0xff]
        %v2643 = vld [vmem:[%s2 + $0x200] sm:$0xff]
        %v2644 = vld [vmem:[%s2 + $0x208] sm:$0xff]
        %v2645 = vld [vmem:[%s2 + $0x210] sm:$0xff]
        %v2646 = vld [vmem:[%s2 + $0x218] sm:$0xff]
        %v2647 = vld [vmem:[%s2 + $0x220] sm:$0xff]
        %v2648 = vld [vmem:[%s2 + $0x228] sm:$0xff]
        %v2649 = vld [vmem:[%s2 + $0x230] sm:$0xff]
        %v2650 = vld [vmem:[%s2 + $0x238] sm:$0xff]
        %v2651 = vld [vmem:[%s2 + $0x240] sm:$0xff]
        %v2652 = vld [vmem:[%s2 + $0x248] sm:$0xff]
        %v2653 = vld [vmem:[%s2 + $0x250] sm:$0xff]
        %v2654 = vld [vmem:[%s2 + $0x258] sm:$0xff]
        %v2655 = vld [vmem:[%s2 + $0x260] sm:$0xff]
        %v2656 = vld [vmem:[%s2 + $0x268] sm:$0xff]
        %v2657 = vld [vmem:[%s2 + $0x270] sm:$0xff]
        %v2658 = vld [vmem:[%s2 + $0x278] sm:$0xff]
        %v2659 = vld [vmem:[%s2 + $0x280] sm:$0xff]
        %v2660 = vld [vmem:[%s2 + $0x288] sm:$0xff]
        %v2661 = vld [vmem:[%s2 + $0x290] sm:$0xff]
        %v2662 = vld [vmem:[%s2 + $0x298] sm:$0xff]
        %v2663 = vld [vmem:[%s2 + $0x2a0] sm:$0xff]
        %v2664 = vld [vmem:[%s2 + $0x2a8] sm:$0xff]
        %v2665 = vld [vmem:[%s2 + $0x2b0] sm:$0xff]
        %v2666 = vld [vmem:[%s2 + $0x2b8] sm:$0xff]
        %v2667 = vld [vmem:[%s2 + $0x2c0] sm:$0xff]
        %v2668 = vld [vmem:[%s2 + $0x2c8] sm:$0xff]
        %v2669 = vld [vmem:[%s2 + $0x2d0] sm:$0xff]
        %v2670 = vld [vmem:[%s2 + $0x2d8] sm:$0xff]
        %v2671 = vld [vmem:[%s2 + $0x2e0] sm:$0xff]
        %v2672 = vld [vmem:[%s2 + $0x2e8] sm:$0xff]
        %v2673 = vld [vmem:[%s2 + $0x2f0] sm:$0xff]
        %v2674 = vld [vmem:[%s2 + $0x2f8] sm:$0xff]
        %v2675 = vld [vmem:[%s2 + $0x300] sm:$0xff]
        %v2676 = vld [vmem:[%s2 + $0x308] sm:$0xff]
        %v2677 = vld [vmem:[%s2 + $0x310] sm:$0xff]
        %v2678 = vld [vmem:[%s2 + $0x318] sm:$0xff]
        %v2679 = vld [vmem:[%s2 + $0x320] sm:$0xff]
        %v2680 = vld [vmem:[%s2 + $0x328] sm:$0xff]
        %v2681 = vld [vmem:[%s2 + $0x330] sm:$0xff]
        %v2682 = vld [vmem:[%s2 + $0x338] sm:$0xff]
        %v2683 = vld [vmem:[%s2 + $0x340] sm:$0xff]
        %v2684 = vld [vmem:[%s2 + $0x348] sm:$0xff]
        %v2685 = vld [vmem:[%s2 + $0x350] sm:$0xff]
        %v2686 = vld [vmem:[%s2 + $0x358] sm:$0xff]
        %v2687 = vld [vmem:[%s2 + $0x360] sm:$0xff]
        %v2688 = vld [vmem:[%s2 + $0x368] sm:$0xff]
        %v2689 = vld [vmem:[%s2 + $0x370] sm:$0xff]
        %v2690 = vld [vmem:[%s2 + $0x378] sm:$0xff]
        %v2691 = vld [vmem:[%s2 + $0x380] sm:$0xff]
        %v2692 = vld [vmem:[%s2 + $0x388] sm:$0xff]
        %v2693 = vld [vmem:[%s2 + $0x390] sm:$0xff]
        %v2694 = vld [vmem:[%s2 + $0x398] sm:$0xff]
        %v2695 = vld [vmem:[%s2 + $0x3a0] sm:$0xff]
        %v2696 = vld [vmem:[%s2 + $0x3a8] sm:$0xff]
        %v2697 = vld [vmem:[%s2 + $0x3b0] sm:$0xff]
        %v2698 = vld [vmem:[%s2 + $0x3b8] sm:$0xff]
        %v2699 = vld [vmem:[%s2 + $0x3c0] sm:$0xff]
        %v2700 = vld [vmem:[%s2 + $0x3c8] sm:$0xff]
        %v2701 = vld [vmem:[%s2 + $0x3d0] sm:$0xff]
        %v2702 = vld [vmem:[%s2 + $0x3d8] sm:$0xff]
        %v2703 = vld [vmem:[%s2 + $0x3e0] sm:$0xff]
        %v2704 = vld [vmem:[%s2 + $0x3e8] sm:$0xff]
        %v2705 = vld [vmem:[%s2 + $0x3f0] sm:$0xff]
        %v2706 = vld [vmem:[%s2 + $0x3f8] sm:$0xff]
        %v2707 = vld [vmem:[%s3] sm:$0x1]
        %v2709 = vlaneseq
        %v2710 = vshrl.u32 %v2709, 7
        %v2711 = vsub.s32 0, %v2710
        %v2712 = vrot.slane %v2707, %v2711
        %vm2778 = vcmask 1041409
        %v2779 = vsel %vm2778, %v2523, %v2515
        %vm2780 = vcmask 1042434
        %v2781 = vsel %vm2780, %v2531, %v2779
        %vm2782 = vcmask 1043459
        %v2783 = vsel %vm2782, %v2539, %v2781
        %vm2784 = vcmask 1044484
        %v2785 = vsel %vm2784, %v2547, %v2783
        %vm2786 = vcmask 1045509
        %v2787 = vsel %vm2786, %v2555, %v2785
        %vm2788 = vcmask 1046534
        %v2789 = vsel %vm2788, %v2563, %v2787
        %vm2790 = vcmask 1047559
        %v2791 = vsel %vm2790, %v2571, %v2789
        %v2792 = vsel %vm2778, %v2524, %v2516
        %v2793 = vsel %vm2780, %v2532, %v2792
        %v2794 = vsel %vm2782, %v2540, %v2793
        %v2795 = vsel %vm2784, %v2548, %v2794
        %v2796 = vsel %vm2786, %v2556, %v2795
        %v2797 = vsel %vm2788, %v2564, %v2796
        %v2798 = vsel %vm2790, %v2572, %v2797
        %v2799 = vsel %vm2778, %v2525, %v2517
        %v2800 = vsel %vm2780, %v2533, %v2799
        %v2801 = vsel %vm2782, %v2541, %v2800
        %v2802 = vsel %vm2784, %v2549, %v2801
        %v2803 = vsel %vm2786, %v2557, %v2802
        %v2804 = vsel %vm2788, %v2565, %v2803
        %v2805 = vsel %vm2790, %v2573, %v2804
        %v2806 = vsel %vm2778, %v2526, %v2518
        %v2807 = vsel %vm2780, %v2534, %v2806
        %v2808 = vsel %vm2782, %v2542, %v2807
        %v2809 = vsel %vm2784, %v2550, %v2808
        %v2810 = vsel %vm2786, %v2558, %v2809
        %v2811 = vsel %vm2788, %v2566, %v2810
        %v2812 = vsel %vm2790, %v2574, %v2811
        %v2813 = vsel %vm2778, %v2527, %v2519
        %v2814 = vsel %vm2780, %v2535, %v2813
        %v2815 = vsel %vm2782, %v2543, %v2814
        %v2816 = vsel %vm2784, %v2551, %v2815
        %v2817 = vsel %vm2786, %v2559, %v2816
        %v2818 = vsel %vm2788, %v2567, %v2817
        %v2819 = vsel %vm2790, %v2575, %v2818
        %v2820 = vsel %vm2778, %v2528, %v2520
        %v2821 = vsel %vm2780, %v2536, %v2820
        %v2822 = vsel %vm2782, %v2544, %v2821
        %v2823 = vsel %vm2784, %v2552, %v2822
        %v2824 = vsel %vm2786, %v2560, %v2823
        %v2825 = vsel %vm2788, %v2568, %v2824
        %v2826 = vsel %vm2790, %v2576, %v2825
        %v2827 = vsel %vm2778, %v2529, %v2521
        %v2828 = vsel %vm2780, %v2537, %v2827
        %v2829 = vsel %vm2782, %v2545, %v2828
        %v2830 = vsel %vm2784, %v2553, %v2829
        %v2831 = vsel %vm2786, %v2561, %v2830
        %v2832 = vsel %vm2788, %v2569, %v2831
        %v2833 = vsel %vm2790, %v2577, %v2832
        %v2834 = vsel %vm2778, %v2530, %v2522
        %v2835 = vsel %vm2780, %v2538, %v2834
        %v2836 = vsel %vm2782, %v2546, %v2835
        %v2837 = vsel %vm2784, %v2554, %v2836
        %v2838 = vsel %vm2786, %v2562, %v2837
        %v2839 = vsel %vm2788, %v2570, %v2838
        %v2840 = vsel %vm2790, %v2578, %v2839
        %2849 = vmatprep.subr.mxu0 0.0
        %2850 = vmatpush1.msra.mxu0 %v2594
        %2851 = vmatprep.subr.mxu0 0.0
        %2852 = vmatpush1.msra.mxu0 %v2593
        %2853 = vmatprep.subr.mxu0 0.0
        %2854 = vmatpush1.msra.mxu0 %v2592
        %2855 = vmatprep.subr.mxu0 0.0
        %2856 = vmatpush1.msra.mxu0 %v2591
        %2857 = vmatprep.subr.mxu0 0.0
        %2858 = vmatpush1.msra.mxu0 %v2590
        %2859 = vmatprep.subr.mxu0 0.0
        %2860 = vmatpush1.msra.mxu0 %v2589
        %2861 = vmatprep.subr.mxu0 0.0
        %2862 = vmatpush1.msra.mxu0 %v2588
        %2863 = vmatprep.subr.mxu0 0.0
        %2864 = vmatpush1.msra.mxu0 %v2587
        %2865 = vmatprep.subr.mxu0 0.0
        %2866 = vmatpush1.msra.mxu0 %v2586
        %2867 = vmatprep.subr.mxu0 0.0
        %2868 = vmatpush1.msra.mxu0 %v2585
        %2869 = vmatprep.subr.mxu0 0.0
        %2870 = vmatpush1.msra.mxu0 %v2584
        %2871 = vmatprep.subr.mxu0 0.0
        %2872 = vmatpush1.msra.mxu0 %v2583
        %2873 = vmatprep.subr.mxu0 0.0
        %2874 = vmatpush1.msra.mxu0 %v2582
        %2875 = vmatprep.subr.mxu0 0.0
        %2876 = vmatpush1.msra.mxu0 %v2581
        %2877 = vmatprep.subr.mxu0 0.0
        %2878 = vmatpush1.msra.mxu0 %v2580
        %2879 = vmatprep.subr.mxu0 0.0
        %2880 = vmatpush1.msra.mxu0 %v2579
        %2881 = vmatprep.subr.mxu0 0.0
        %2882 = vmatpush2.msra.mxu0 %v2610
        %2883 = vmatprep.subr.mxu0 0.0
        %2884 = vmatpush2.msra.mxu0 %v2609
        %2885 = vmatprep.subr.mxu0 0.0
        %2886 = vmatpush2.msra.mxu0 %v2608
        %2887 = vmatprep.subr.mxu0 0.0
        %2888 = vmatpush2.msra.mxu0 %v2607
        %2889 = vmatprep.subr.mxu0 0.0
        %2890 = vmatpush2.msra.mxu0 %v2606
        %2891 = vmatprep.subr.mxu0 0.0
        %2892 = vmatpush2.msra.mxu0 %v2605
        %2893 = vmatprep.subr.mxu0 0.0
        %2894 = vmatpush2.msra.mxu0 %v2604
        %2895 = vmatprep.subr.mxu0 0.0
        %2896 = vmatpush2.msra.mxu0 %v2603
        %2897 = vmatprep.subr.mxu0 0.0
        %2898 = vmatpush2.msra.mxu0 %v2602
        %2899 = vmatprep.subr.mxu0 0.0
        %2900 = vmatpush2.msra.mxu0 %v2601
        %2901 = vmatprep.subr.mxu0 0.0
        %2902 = vmatpush2.msra.mxu0 %v2600
        %2903 = vmatprep.subr.mxu0 0.0
        %2904 = vmatpush2.msra.mxu0 %v2599
        %2905 = vmatprep.subr.mxu0 0.0
        %2906 = vmatpush2.msra.mxu0 %v2598
        %2907 = vmatprep.subr.mxu0 0.0
        %2908 = vmatpush2.msra.mxu0 %v2597
        %2909 = vmatprep.subr.mxu0 0.0
        %2910 = vmatpush2.msra.mxu0 %v2596
        %2911 = vmatprep.subr.mxu0 0.0
        %2912 = vmatpush2.msra.mxu0 %v2595
        %2913 = vmatprep.mubr.f32.mxu0 %v2798
        %2914 = vmatmul.mubr.f32.gmra.mxu0 %v2791
        %v2915 = vpop.f32.mrf.mxu0
        %v2916 = vadd.f32 %v2712, %v2915
        %v2917 = vpop.f32.mrf.mxu0
        %2918 = vdwg.mxu0
        %2919 = vmatprep.subr.mxu0 0.0
        %2920 = vmatpush1.msra.mxu0 %v2626
        %2921 = vmatprep.subr.mxu0 0.0
        %2922 = vmatpush1.msra.mxu0 %v2625
        %2923 = vmatprep.subr.mxu0 0.0
        %2924 = vmatpush1.msra.mxu0 %v2624
        %2925 = vmatprep.subr.mxu0 0.0
        %2926 = vmatpush1.msra.mxu0 %v2623
        %2927 = vmatprep.subr.mxu0 0.0
        %2928 = vmatpush1.msra.mxu0 %v2622
        %2929 = vmatprep.subr.mxu0 0.0
        %2930 = vmatpush1.msra.mxu0 %v2621
        %2931 = vmatprep.subr.mxu0 0.0
        %2932 = vmatpush1.msra.mxu0 %v2620
        %2933 = vmatprep.subr.mxu0 0.0
        %2934 = vmatpush1.msra.mxu0 %v2619
        %2935 = vmatprep.subr.mxu0 0.0
        %2936 = vmatpush1.msra.mxu0 %v2618
        %2937 = vmatprep.subr.mxu0 0.0
        %2938 = vmatpush1.msra.mxu0 %v2617
        %2939 = vmatprep.subr.mxu0 0.0
        %2940 = vmatpush1.msra.mxu0 %v2616
        %2941 = vmatprep.subr.mxu0 0.0
        %2942 = vmatpush1.msra.mxu0 %v2615
        %2943 = vmatprep.subr.mxu0 0.0
        %2944 = vmatpush1.msra.mxu0 %v2614
        %2945 = vmatprep.subr.mxu0 0.0
        %2946 = vmatpush1.msra.mxu0 %v2613
        %2947 = vmatprep.subr.mxu0 0.0
        %2948 = vmatpush1.msra.mxu0 %v2612
        %2949 = vmatprep.subr.mxu0 0.0
        %2950 = vmatpush1.msra.mxu0 %v2611
        %2951 = vmatprep.subr.mxu0 0.0
        %2952 = vmatpush2.msra.mxu0 %v2642
        %2953 = vmatprep.subr.mxu0 0.0
        %2954 = vmatpush2.msra.mxu0 %v2641
        %2955 = vmatprep.subr.mxu0 0.0
        %2956 = vmatpush2.msra.mxu0 %v2640
        %2957 = vmatprep.subr.mxu0 0.0
        %2958 = vmatpush2.msra.mxu0 %v2639
        %2959 = vmatprep.subr.mxu0 0.0
        %2960 = vmatpush2.msra.mxu0 %v2638
        %2961 = vmatprep.subr.mxu0 0.0
        %2962 = vmatpush2.msra.mxu0 %v2637
        %2963 = vmatprep.subr.mxu0 0.0
        %2964 = vmatpush2.msra.mxu0 %v2636
        %2965 = vmatprep.subr.mxu0 0.0
        %2966 = vmatpush2.msra.mxu0 %v2635
        %2967 = vmatprep.subr.mxu0 0.0
        %2968 = vmatpush2.msra.mxu0 %v2634
        %2969 = vmatprep.subr.mxu0 0.0
        %2970 = vmatpush2.msra.mxu0 %v2633
        %2971 = vmatprep.subr.mxu0 0.0
        %2972 = vmatpush2.msra.mxu0 %v2632
        %2973 = vmatprep.subr.mxu0 0.0
        %2974 = vmatpush2.msra.mxu0 %v2631
        %2975 = vmatprep.subr.mxu0 0.0
        %2976 = vmatpush2.msra.mxu0 %v2630
        %2977 = vmatprep.subr.mxu0 0.0
        %2978 = vmatpush2.msra.mxu0 %v2629
        %2979 = vmatprep.subr.mxu0 0.0
        %2980 = vmatpush2.msra.mxu0 %v2628
        %2981 = vmatprep.subr.mxu0 0.0
        %2982 = vmatpush2.msra.mxu0 %v2627
        %2983 = vmatprep.mubr.f32.mxu0 %v2812
        %2984 = vmatmul.mubr.f32.gmra.mxu0 %v2805
        %v2985 = vpop.f32.mrf.mxu0
        %v2986 = vadd.f32 %v2916, %v2985
        %v2987 = vpop.f32.mrf.mxu0
        %2988 = vdwg.mxu0
        %2989 = vmatprep.subr.mxu0 0.0
        %2990 = vmatpush1.msra.mxu0 %v2658
        %2991 = vmatprep.subr.mxu0 0.0
        %2992 = vmatpush1.msra.mxu0 %v2657
        %2993 = vmatprep.subr.mxu0 0.0
        %2994 = vmatpush1.msra.mxu0 %v2656
        %2995 = vmatprep.subr.mxu0 0.0
        %2996 = vmatpush1.msra.mxu0 %v2655
        %2997 = vmatprep.subr.mxu0 0.0
        %2998 = vmatpush1.msra.mxu0 %v2654
        %2999 = vmatprep.subr.mxu0 0.0
        %3000 = vmatpush1.msra.mxu0 %v2653
        %3001 = vmatprep.subr.mxu0 0.0
        %3002 = vmatpush1.msra.mxu0 %v2652
        %3003 = vmatprep.subr.mxu0 0.0
        %3004 = vmatpush1.msra.mxu0 %v2651
        %3005 = vmatprep.subr.mxu0 0.0
        %3006 = vmatpush1.msra.mxu0 %v2650
        %3007 = vmatprep.subr.mxu0 0.0
        %3008 = vmatpush1.msra.mxu0 %v2649
        %3009 = vmatprep.subr.mxu0 0.0
        %3010 = vmatpush1.msra.mxu0 %v2648
        %3011 = vmatprep.subr.mxu0 0.0
        %3012 = vmatpush1.msra.mxu0 %v2647
        %3013 = vmatprep.subr.mxu0 0.0
        %3014 = vmatpush1.msra.mxu0 %v2646
        %3015 = vmatprep.subr.mxu0 0.0
        %3016 = vmatpush1.msra.mxu0 %v2645
        %3017 = vmatprep.subr.mxu0 0.0
        %3018 = vmatpush1.msra.mxu0 %v2644
        %3019 = vmatprep.subr.mxu0 0.0
        %3020 = vmatpush1.msra.mxu0 %v2643
        %3021 = vmatprep.subr.mxu0 0.0
        %3022 = vmatpush2.msra.mxu0 %v2674
        %3023 = vmatprep.subr.mxu0 0.0
        %3024 = vmatpush2.msra.mxu0 %v2673
        %3025 = vmatprep.subr.mxu0 0.0
        %3026 = vmatpush2.msra.mxu0 %v2672
        %3027 = vmatprep.subr.mxu0 0.0
        %3028 = vmatpush2.msra.mxu0 %v2671
        %3029 = vmatprep.subr.mxu0 0.0
        %3030 = vmatpush2.msra.mxu0 %v2670
        %3031 = vmatprep.subr.mxu0 0.0
        %3032 = vmatpush2.msra.mxu0 %v2669
        %3033 = vmatprep.subr.mxu0 0.0
        %3034 = vmatpush2.msra.mxu0 %v2668
        %3035 = vmatprep.subr.mxu0 0.0
        %3036 = vmatpush2.msra.mxu0 %v2667
        %3037 = vmatprep.subr.mxu0 0.0
        %3038 = vmatpush2.msra.mxu0 %v2666
        %3039 = vmatprep.subr.mxu0 0.0
        %3040 = vmatpush2.msra.mxu0 %v2665
        %3041 = vmatprep.subr.mxu0 0.0
        %3042 = vmatpush2.msra.mxu0 %v2664
        %3043 = vmatprep.subr.mxu0 0.0
        %3044 = vmatpush2.msra.mxu0 %v2663
        %3045 = vmatprep.subr.mxu0 0.0
        %3046 = vmatpush2.msra.mxu0 %v2662
        %3047 = vmatprep.subr.mxu0 0.0
        %3048 = vmatpush2.msra.mxu0 %v2661
        %3049 = vmatprep.subr.mxu0 0.0
        %3050 = vmatpush2.msra.mxu0 %v2660
        %3051 = vmatprep.subr.mxu0 0.0
        %3052 = vmatpush2.msra.mxu0 %v2659
        %3053 = vmatprep.mubr.f32.mxu0 %v2826
        %3054 = vmatmul.mubr.f32.gmra.mxu0 %v2819
        %v3055 = vpop.f32.mrf.mxu0
        %v3056 = vadd.f32 %v2986, %v3055
        %v3057 = vpop.f32.mrf.mxu0
        %3058 = vdwg.mxu0
        %3059 = vmatprep.subr.mxu0 0.0
        %3060 = vmatpush1.msra.mxu0 %v2690
        %3061 = vmatprep.subr.mxu0 0.0
        %3062 = vmatpush1.msra.mxu0 %v2689
        %3063 = vmatprep.subr.mxu0 0.0
        %3064 = vmatpush1.msra.mxu0 %v2688
        %3065 = vmatprep.subr.mxu0 0.0
        %3066 = vmatpush1.msra.mxu0 %v2687
        %3067 = vmatprep.subr.mxu0 0.0
        %3068 = vmatpush1.msra.mxu0 %v2686
        %3069 = vmatprep.subr.mxu0 0.0
        %3070 = vmatpush1.msra.mxu0 %v2685
        %3071 = vmatprep.subr.mxu0 0.0
        %3072 = vmatpush1.msra.mxu0 %v2684
        %3073 = vmatprep.subr.mxu0 0.0
        %3074 = vmatpush1.msra.mxu0 %v2683
        %3075 = vmatprep.subr.mxu0 0.0
        %3076 = vmatpush1.msra.mxu0 %v2682
        %3077 = vmatprep.subr.mxu0 0.0
        %3078 = vmatpush1.msra.mxu0 %v2681
        %3079 = vmatprep.subr.mxu0 0.0
        %3080 = vmatpush1.msra.mxu0 %v2680
        %3081 = vmatprep.subr.mxu0 0.0
        %3082 = vmatpush1.msra.mxu0 %v2679
        %3083 = vmatprep.subr.mxu0 0.0
        %3084 = vmatpush1.msra.mxu0 %v2678
        %3085 = vmatprep.subr.mxu0 0.0
        %3086 = vmatpush1.msra.mxu0 %v2677
        %3087 = vmatprep.subr.mxu0 0.0
        %3088 = vmatpush1.msra.mxu0 %v2676
        %3089 = vmatprep.subr.mxu0 0.0
        %3090 = vmatpush1.msra.mxu0 %v2675
        %3091 = vmatprep.subr.mxu0 0.0
        %3092 = vmatpush2.msra.mxu0 %v2706
        %3093 = vmatprep.subr.mxu0 0.0
        %3094 = vmatpush2.msra.mxu0 %v2705
        %3095 = vmatprep.subr.mxu0 0.0
        %3096 = vmatpush2.msra.mxu0 %v2704
        %3097 = vmatprep.subr.mxu0 0.0
        %3098 = vmatpush2.msra.mxu0 %v2703
        %3099 = vmatprep.subr.mxu0 0.0
        %3100 = vmatpush2.msra.mxu0 %v2702
        %3101 = vmatprep.subr.mxu0 0.0
        %3102 = vmatpush2.msra.mxu0 %v2701
        %3103 = vmatprep.subr.mxu0 0.0
        %3104 = vmatpush2.msra.mxu0 %v2700
        %3105 = vmatprep.subr.mxu0 0.0
        %3106 = vmatpush2.msra.mxu0 %v2699
        %3107 = vmatprep.subr.mxu0 0.0
        %3108 = vmatpush2.msra.mxu0 %v2698
        %3109 = vmatprep.subr.mxu0 0.0
        %3110 = vmatpush2.msra.mxu0 %v2697
        %3111 = vmatprep.subr.mxu0 0.0
        %3112 = vmatpush2.msra.mxu0 %v2696
        %3113 = vmatprep.subr.mxu0 0.0
        %3114 = vmatpush2.msra.mxu0 %v2695
        %3115 = vmatprep.subr.mxu0 0.0
        %3116 = vmatpush2.msra.mxu0 %v2694
        %3117 = vmatprep.subr.mxu0 0.0
        %3118 = vmatpush2.msra.mxu0 %v2693
        %3119 = vmatprep.subr.mxu0 0.0
        %3120 = vmatpush2.msra.mxu0 %v2692
        %3121 = vmatprep.subr.mxu0 0.0
        %3122 = vmatpush2.msra.mxu0 %v2691
        %3123 = vmatprep.mubr.f32.mxu0 %v2840
        %3124 = vmatmul.mubr.f32.gmra.mxu0 %v2833
        %v3125 = vpop.f32.mrf.mxu0
        %v3126 = vadd.f32 %v3056, %v3125
        %v3127 = vpop.f32.mrf.mxu0
        %3128 = vdwg.mxu0
        %v3129 = vsub.f32 0.0, %v3126
        %v3130 = vmul.f32 %v3129, 1.442695
        %v3131 = vpow.pop %v3130
        %v3132 = vadd.f32 %v3131, 1.0
        %v3133 = vrcp.pop %v3132
        %v3134 = vmul.f32 1.0, %v3133
        %3135 = vst [vmem:[%s211] sm:$0xff] %v3134
        %s3136 = sand.u32 %s120, 1
        %s3137 = scalar_lea.sflag [#allocation3], %s3136
        %s3138 = sand.u32 %s120, 1
        %s3139 = smul.addr %s3138, 8
        %s3140 = scalar_lea.vmem [#allocation2], %s3139
        // Predicated region
        $region37: #{cxrnet_head.1} parent=35 // pred_check
          %p3141 = pneg %p130
        $region38: #{cxrnet_head.1} parent=35 // pred_check_branch
          %3143 = sbr.rel (%p3141) target = $region40
        $region39: #{cxrnet_head.1} parent=35 // pred_region
          %s3145 = ssub.s32 128, 128
          %3146 = vsyncadd %s3137, %s3145
          %s3147 = smul.addr %s18, 128
          %s3148 = scalar_lea.hbm %s4, %s3147
          %s3150 = sshll.u32 %s3140, 4
          %s3151 = int_to_ptr.vmem [resolvable:$true] %s3150
          %3153 = dma.vmem_to_hbm [thread:$0]  %s3151, 128, %s3148, %s3137
        $region40: #{cxrnet_head.1} parent=35 // pred_fallthru
          _
      $region36: #{cxrnet_head.1} parent=5 // pred_fallthru
        _
      %p3154 = scmp.le.s32.totalorder 2, %s13
      // Predicated region
      $region41: #{cxrnet_head.1} parent=5 // pred_check
        %p3155 = pneg %p3154
      $region42: #{cxrnet_head.1} parent=5 // pred_check_branch
        %3157 = sbr.rel (%p3155) target = $region44
      $region43: #{cxrnet_head.1} parent=5 // pred_region
        %s3158 = ssub.s32 %s13, 2
        // Predicated region
        $region45: #{cxrnet_head.1} parent=43 // pred_check
          %p3159 = pneg %p136
        $region46: #{cxrnet_head.1} parent=43 // pred_check_branch
          %3161 = sbr.rel (%p3159) target = $region48
        $region47: #{cxrnet_head.1} parent=43 // pred_region
          %s3162 = sand.u32 %s121, 1
          %s3163 = scalar_lea.sflag [#allocation3], %s3162
          %s3164 = sand.u32 %s121, 1
          %s3165 = smul.addr %s3164, 8
          %s3166 = scalar_lea.vmem [#allocation2], %s3165
          %3167 = dma.done %s3163, 128
        $region48: #{cxrnet_head.1} parent=43 // pred_fallthru
          _
      $region44: #{cxrnet_head.1} parent=5 // pred_fallthru
        _
    $region6: #{cxrnet_head.1} parent=1 // loop_footer
      %s17 = sadd.s32 1, %s13
    $region7: #{cxrnet_head.1} parent=1 // loop_footer_branch
      %12 = sbr.rel target = $region3
    $region8: #{cxrnet_head.1} parent=1 // loop_exit
      _
    %3168 = vsyncpa [#allocation3], 1
    %s3169 = scalar_lea.sflag [#allocation3], 1
    %3170 = vsyncpa %s3169, 1

</llo_original>
